<compile_context>
chip_gen: v7x
topology: tpu7x:2x2x1
jax: 0.10.0
libtpu: 0.0.40
codegen_flags: <defaults>
</compile_context>

<pallas_src>
import functools

import jax
import jax.numpy as jnp
import numpy as np
from jax.experimental import pallas as pl
from jax.experimental.pallas import tpu as pltpu


# ----------------------------- fused Pallas kernel -----------------------------

def _deep_gat_kernel(x_ref, nb_ref, pool_ref, xg_ref,
                     w1_ref, a1_ref, b1_ref,
                     w2_ref, a2_ref, b2_ref,
                     w3_ref, a3_ref, b3_ref,
                     lw1p_ref, lw1g_ref, lb1_ref, lw2_ref, lb2_ref,
                     o_ref, buf_a, buf_b, *, heads, f_out):
    """3 fused GAT layers (VMEM-resident x) + mean-pool + MLP head."""
    # Zero the ping-pong buffers once so the padded lanes stay exactly 0 across
    # all layers (padded weight rows are zero, so padding never contaminates).
    buf_a[...] = jnp.zeros_like(buf_a)
    buf_b[...] = jnp.zeros_like(buf_b)

    # Additive attention-mask bias, hoisted out of the per-head loop:
    # 0 where an edge j->i exists (self-loops included), -1e30 otherwise.
    neg_bias = nb_ref[...].astype(jnp.float32)                      # [N, N]

    def gat_layer(x, w_ref, att_ref, b_ref, out_ref):
        # x: [N, Fin(_padded)] f32 ; w: [Fin(_padded), PAD] ; att: [PAD, 2H]
        xp = jnp.dot(x, w_ref[...], preferred_element_type=jnp.float32)       # [N, PAD]
        # All per-head a_src / a_dst scores in a single MXU matmul.
        scores = jnp.dot(xp, att_ref[...], preferred_element_type=jnp.float32)  # [N, 2H]
        for h in range(heads):                                     # heads is small & static
            a_src = scores[:, h:h + 1]                             # [N, 1]
            a_dst = scores[:, heads + h:heads + h + 1]             # [N, 1]
            # e[i, j] = leaky_relu(a_dst[i] + a_src[j], 0.2) + mask_bias[i, j]
            e = a_dst + jnp.transpose(a_src)                       # [N, N]
            e = jnp.where(e > 0, e, 0.2 * e) + neg_bias
            # softmax over source nodes j; masked entries underflow to exactly 0.
            m = jnp.max(e, axis=-1, keepdims=True)
            p = jnp.exp(e - m)
            alpha = p / jnp.sum(p, axis=-1, keepdims=True)         # [N, N]
            xh = xp[:, h * f_out:(h + 1) * f_out]                  # [N, Fout]
            # write the head result directly into its column slab (no concat)
            out_ref[:, h * f_out:(h + 1) * f_out] = jnp.dot(
                alpha, xh, preferred_element_type=jnp.float32)
        # bias + ELU over the full (padded) width; ELU(0)=0 keeps padding zero.
        y = out_ref[...] + b_ref[...]
        out_ref[...] = jnp.where(y > 0, y, jnp.exp(jnp.minimum(y, 0.0)) - 1.0)

    gat_layer(x_ref[...].astype(jnp.float32), w1_ref, a1_ref, b1_ref, buf_a)
    gat_layer(buf_a[...], w2_ref, a2_ref, b2_ref, buf_b)
    gat_layer(buf_b[...], w3_ref, a3_ref, b3_ref, buf_a)

    # global_mean_pool as a matmul; dropout is identity in eval mode.
    pooled = jnp.dot(pool_ref[...], buf_a[...],
                     preferred_element_type=jnp.float32)            # [B, PAD]
    # lin1 split into pooled-part and global-part -> no lane concat needed.
    h1 = (jnp.dot(pooled, lw1p_ref[...], preferred_element_type=jnp.float32)
          + jnp.dot(xg_ref[...], lw1g_ref[...], preferred_element_type=jnp.float32)
          + lb1_ref[...])
    h1 = jnp.maximum(h1, 0.0)                                       # ReLU
    o_ref[...] = (jnp.dot(h1, lw2_ref[...], preferred_element_type=jnp.float32)
                  + lb2_ref[...])


# ----------------------------- wrapper -----------------------------

def _pad2(a, rows, cols):
    return jnp.pad(a, ((0, rows - a.shape[0]), (0, cols - a.shape[1])))


def _attention_matrix(att_src, att_dst, heads, hidden, width):
    """Block-diagonal [width, 2H] matrix: xp @ A gives all a_src / a_dst scores."""
    a = jnp.zeros((width, 2 * heads), jnp.float32)
    for h in range(heads):
        a = a.at[h * hidden:(h + 1) * hidden, h].set(att_src[h])
        a = a.at[h * hidden:(h + 1) * hidden, heads + h].set(att_dst[h])
    return a


def deep_gat_forward(params, x, adj_bias, pool_mat, x_global, *, heads, hidden):
    n, in_ch = x.shape
    b = pool_mat.shape[0]
    g = x_global.shape[1]
    out_ch = params["lw2"].shape[1]
    hf = heads * hidden
    pad_w = ((hf + 127) // 128) * 128          # lane-dense padded feature width

    # Zero-padded (lane-dense) parameters; zero padding keeps the math exact.
    w1p = _pad2(params["w1"], in_ch, pad_w)
    w2p = _pad2(params["w2"], pad_w, pad_w)
    w3p = _pad2(params["w3"], pad_w, pad_w)
    a1 = _attention_matrix(params["as1"], params["ad1"], heads, hidden, pad_w)
    a2 = _attention_matrix(params["as2"], params["ad2"], heads, hidden, pad_w)
    a3 = _attention_matrix(params["as3"], params["ad3"], heads, hidden, pad_w)
    b1p = _pad2(params["b1"], 1, pad_w)
    b2p = _pad2(params["b2"], 1, pad_w)
    b3p = _pad2(params["b3"], 1, pad_w)
    lw1_pool = _pad2(params["lw1"][:hf, :], pad_w, hidden)          # [PAD, hid]
    lw1_glob = params["lw1"][hf:, :]                                # [G, hid]

    args = (x, adj_bias, pool_mat, x_global,
            w1p, a1, b1p, w2p, a2, b2p, w3p, a3, b3p,
            lw1_pool, lw1_glob, params["lb1"], params["lw2"], params["lb2"])

    # Advisory cost estimate for XLA's scheduler.
    flops = int(
        2 * n * in_ch * pad_w + 2 * 2 * n * pad_w * pad_w            # xp matmuls
        + 3 * 2 * n * pad_w * 2 * heads                              # score matmuls
        + 3 * heads * (2 * n * n * hidden + 8 * n * n)               # attn matmul + softmax
        + 2 * b * n * pad_w + 2 * b * pad_w * hidden
        + 2 * b * g * hidden + 2 * b * hidden * out_ch)
    transcendentals = int(3 * heads * n * n + 3 * n * hf)
    bytes_accessed = int(sum(int(a.size) * a.dtype.itemsize for a in args)
                         + b * out_ch * 4)

    return pl.pallas_call(
        functools.partial(_deep_gat_kernel, heads=heads, f_out=hidden),
        out_shape=jax.ShapeDtypeStruct((b, out_ch), jnp.float32),
        in_specs=[pl.BlockSpec(memory_space=pltpu.MemorySpace.VMEM)] * len(args),
        out_specs=pl.BlockSpec(memory_space=pltpu.MemorySpace.VMEM),
        scratch_shapes=[pltpu.VMEM((n, pad_w), jnp.float32),   # ping
                        pltpu.VMEM((n, pad_w), jnp.float32)],  # pong
        compiler_params=pltpu.CompilerParams(vmem_limit_bytes=32 * 1024 * 1024),
        cost_estimate=pl.CostEstimate(flops=flops,
                                      transcendentals=transcendentals,
                                      bytes_accessed=bytes_accessed),
    )(*args)


# --------------------- pure-JAX reference (same math) ---------------------

def _ref_gat_layer(x, w, a_s, a_d, b, adj, heads, f_out):
    xp = x @ w
    outs = []
    for h in range(heads):
        xh = xp[:, h * f_out:(h + 1) * f_out]
        s = (xh * a_s[h][None, :]).sum(-1)
        d = (xh * a_d[h][None, :]).sum(-1)
        e = d[:, None] + s[None, :]
        e = jnp.where(e > 0, e, 0.2 * e)
        e = jnp.where(adj > 0, e, -1e30)
        p = jnp.where(adj > 0, jnp.exp(e - e.max(-1, keepdims=True)), 0.0)
        alpha = p / p.sum(-1, keepdims=True)
        outs.append(alpha @ xh)
    out = jnp.concatenate(outs, -1) + b
    return jnp.where(out > 0, out, jnp.expm1(out))


def _ref_forward(params, x, adj, pool_mat, xg, heads, hidden):
    x = _ref_gat_layer(x, params["w1"], params["as1"], params["ad1"], params["b1"], adj, heads, hidden)
    x = _ref_gat_layer(x, params["w2"], params["as2"], params["ad2"], params["b2"], adj, heads, hidden)
    x = _ref_gat_layer(x, params["w3"], params["as3"], params["ad3"], params["b3"], adj, heads, hidden)
    pooled = pool_mat @ x
    feat = jnp.concatenate([pooled, xg], -1)
    h = jnp.maximum(feat @ params["lw1"] + params["lb1"], 0.0)
    return h @ params["lw2"] + params["lb2"]


# --------------------------------- main -------------------------------------

if __name__ == "__main__":
    # small synthetic problem
    N = 16            # nodes
    IN_CH = 8         # in_channels
    HID = 32          # hidden_channels
    OUT_CH = 4        # out_channels (num classes)
    GLOBAL = 6        # global_features_dim
    HEADS = 2
    B = 2             # graphs in the batch

    key = jax.random.PRNGKey(0)
    keys = jax.random.split(key, 20)

    # node features, edges, batch assignment, global features
    x = jax.random.normal(keys[0], (N, IN_CH), dtype=jnp.float32)
    src = jnp.concatenate([jax.random.randint(keys[1], (12,), 0, N // 2),
                           jax.random.randint(keys[2], (12,), N // 2, N)])
    dst = jnp.concatenate([jax.random.randint(keys[3], (12,), 0, N // 2),
                           jax.random.randint(keys[4], (12,), N // 2, N)])
    edge_index = jnp.stack([src, dst])                       # [2, E]
    batch = jnp.concatenate([jnp.zeros(N // 2, jnp.int32),
                             jnp.ones(N // 2, jnp.int32)])   # [N]
    x_global = jax.random.normal(keys[5], (B, GLOBAL), dtype=jnp.float32)

    # glue: dense adjacency mask adj[dst, src] = 1, plus self-loops
    adj = jnp.zeros((N, N), jnp.float32).at[edge_index[1], edge_index[0]].set(1.0)
    adj = adj.at[jnp.arange(N), jnp.arange(N)].set(1.0)
    # precomputed additive attention-mask bias (bf16 halves the O(N^2) DMA)
    adj_bias = jnp.where(adj > 0, 0.0, -1e30).astype(jnp.bfloat16)

    # glue: global_mean_pool as matmul pool[b, n] = (batch[n]==b)/count_b
    one_hot = (batch[None, :] == jnp.arange(B)[:, None]).astype(jnp.float32)  # [B, N]
    pool_mat = one_hot / jnp.sum(one_hot, axis=1, keepdims=True)

    # deterministic parameter init (shapes follow the PyTorch module __init__)
    def init(k, shape, scale=0.1):
        return scale * jax.random.normal(k, shape, dtype=jnp.float32)

    params = {
        # gat1: in -> hidden, heads
        "w1": init(keys[6], (IN_CH, HEADS * HID)),
        "as1": init(keys[7], (HEADS, HID)),
        "ad1": init(keys[8], (HEADS, HID)),
        "b1": init(keys[9], (1, HEADS * HID)),
        # gat2: hidden*heads -> hidden, heads
        "w2": init(keys[10], (HEADS * HID, HEADS * HID)),
        "as2": init(keys[11], (HEADS, HID)),
        "ad2": init(keys[12], (HEADS, HID)),
        "b2": init(keys[13], (1, HEADS * HID)),
        # gat3: hidden*heads -> hidden, heads
        "w3": init(keys[14], (HEADS * HID, HEADS * HID)),
        "as3": init(keys[15], (HEADS, HID)),
        "ad3": init(keys[16], (HEADS, HID)),
        "b3": init(keys[17], (1, HEADS * HID)),
        # lin1: (hidden*heads + global) -> hidden ; lin2: hidden -> out
        "lw1": init(keys[18], (HEADS * HID + GLOBAL, HID)),
        "lb1": jnp.zeros((1, HID), jnp.float32),
        "lw2": init(keys[19], (HID, OUT_CH)),
        "lb2": jnp.zeros((1, OUT_CH), jnp.float32),
    }

    out = deep_gat_forward(params, x, adj_bias, pool_mat, x_global,
                           heads=HEADS, hidden=HID)
    out = jax.block_until_ready(out)

    ref = _ref_forward(params, x, adj, pool_mat, x_global, HEADS, HID)
    np.testing.assert_allclose(np.asarray(out), np.asarray(ref),
                               rtol=1e-3, atol=1e-3)

    assert out.shape == (B, OUT_CH)
    print("KERNEL_OK")
</pallas_src>

<mosaic_0001>
module attributes {stable_mosaic.version = 11 : i64} {
  func.func @_deep_gat_kernel(%arg0: memref<16x8xf32, #tpu.memory_space<vmem>>, %arg1: memref<16x16xbf16, #tpu.memory_space<vmem>>, %arg2: memref<2x16xf32, #tpu.memory_space<vmem>>, %arg3: memref<2x6xf32, #tpu.memory_space<vmem>>, %arg4: memref<8x128xf32, #tpu.memory_space<vmem>>, %arg5: memref<128x4xf32, #tpu.memory_space<vmem>>, %arg6: memref<1x128xf32, #tpu.memory_space<vmem>>, %arg7: memref<128x128xf32, #tpu.memory_space<vmem>>, %arg8: memref<128x4xf32, #tpu.memory_space<vmem>>, %arg9: memref<1x128xf32, #tpu.memory_space<vmem>>, %arg10: memref<128x128xf32, #tpu.memory_space<vmem>>, %arg11: memref<128x4xf32, #tpu.memory_space<vmem>>, %arg12: memref<1x128xf32, #tpu.memory_space<vmem>>, %arg13: memref<128x32xf32, #tpu.memory_space<vmem>>, %arg14: memref<6x32xf32, #tpu.memory_space<vmem>>, %arg15: memref<1x32xf32, #tpu.memory_space<vmem>>, %arg16: memref<32x4xf32, #tpu.memory_space<vmem>>, %arg17: memref<1x4xf32, #tpu.memory_space<vmem>>, %arg18: memref<2x4xf32, #tpu.memory_space<vmem>>, %arg19: memref<16x128xf32, #tpu.memory_space<vmem>>, %arg20: memref<16x128xf32, #tpu.memory_space<vmem>>) attributes {dimension_semantics = [], scalar_prefetch = 0 : i64, scratch_operands = 2 : i64, tpu.core_type = #tpu.core_type<tc>} {
    %cst = arith.constant 0.000000e+00 : f32
    %0 = vector.broadcast %cst : f32 to vector<16x128xf32>
    %c0 = arith.constant 0 : index
    %c0_0 = arith.constant 0 : index
    %1 = vector.load %arg19[%c0, %c0_0] : memref<16x128xf32, #tpu.memory_space<vmem>>, vector<16x128xf32>
    tpu.vector_store %arg19[%c0, %c0_0], %0 {strides = array<i32>} : memref<16x128xf32, #tpu.memory_space<vmem>>, vector<16x128xf32>,
    %cst_1 = arith.constant 0.000000e+00 : f32
    %2 = vector.broadcast %cst_1 : f32 to vector<16x128xf32>
    %c0_2 = arith.constant 0 : index
    %c0_3 = arith.constant 0 : index
    %3 = vector.load %arg20[%c0_2, %c0_3] : memref<16x128xf32, #tpu.memory_space<vmem>>, vector<16x128xf32>
    tpu.vector_store %arg20[%c0_2, %c0_3], %2 {strides = array<i32>} : memref<16x128xf32, #tpu.memory_space<vmem>>, vector<16x128xf32>,
    %c0_4 = arith.constant 0 : index
    %c0_5 = arith.constant 0 : index
    %4 = vector.load %arg1[%c0_4, %c0_5] : memref<16x16xbf16, #tpu.memory_space<vmem>>, vector<16x16xbf16>
    %5 = arith.extf %4 : vector<16x16xbf16> to vector<16x16xf32>
    %c0_6 = arith.constant 0 : index
    %c0_7 = arith.constant 0 : index
    %6 = vector.load %arg0[%c0_6, %c0_7] : memref<16x8xf32, #tpu.memory_space<vmem>>, vector<16x8xf32>
    %c0_8 = arith.constant 0 : index
    %c0_9 = arith.constant 0 : index
    %7 = vector.load %arg4[%c0_8, %c0_9] : memref<8x128xf32, #tpu.memory_space<vmem>>, vector<8x128xf32>
    %cst_10 = arith.constant dense<0.000000e+00> : vector<16x128xf32>
    %8 = tpu.matmul %6, %7, %cst_10 {dimension_numbers = #tpu.dot_dimension_numbers<[1], [0], [0], [1], [0, 0, 1, 1], [], []>} : vector<16x8xf32>, vector<8x128xf32>, vector<16x128xf32> -> vector<16x128xf32>
    %c0_11 = arith.constant 0 : index
    %c0_12 = arith.constant 0 : index
    %9 = vector.load %arg5[%c0_11, %c0_12] : memref<128x4xf32, #tpu.memory_space<vmem>>, vector<128x4xf32>
    %cst_13 = arith.constant dense<0.000000e+00> : vector<16x4xf32>
    %10 = tpu.matmul %8, %9, %cst_13 {dimension_numbers = #tpu.dot_dimension_numbers<[1], [0], [0], [1], [0, 0, 1, 1], [], []>} : vector<16x128xf32>, vector<128x4xf32>, vector<16x4xf32> -> vector<16x4xf32>
    %11 = vector.extract_strided_slice %10 {offsets = [0, 0], sizes = [16, 1], strides = [1, 1]} : vector<16x4xf32> to vector<16x1xf32>
    %12 = vector.extract_strided_slice %10 {offsets = [0, 2], sizes = [16, 1], strides = [1, 1]} : vector<16x4xf32> to vector<16x1xf32>
    %13 = tpu.transpose %11, [1, 0] : vector<16x1xf32> -> vector<1x16xf32>
    %14 = vector.broadcast %12 : vector<16x1xf32> to vector<16x16xf32>
    %15 = vector.broadcast %13 : vector<1x16xf32> to vector<16x16xf32>
    %16 = arith.addf %14, %15 : vector<16x16xf32>
    %cst_14 = arith.constant 0.000000e+00 : f32
    %17 = vector.broadcast %cst_14 : f32 to vector<16x16xf32>
    %18 = arith.cmpf ogt, %16, %17 : vector<16x16xf32>
    %cst_15 = arith.constant 2.000000e-01 : f32
    %19 = vector.broadcast %cst_15 : f32 to vector<16x16xf32>
    %20 = arith.mulf %19, %16 : vector<16x16xf32>
    %21 = arith.select %18, %16, %20 : vector<16x16xi1>, vector<16x16xf32>
    %22 = arith.addf %21, %5 : vector<16x16xf32>
    %cst_16 = arith.constant dense<0xFF800000> : vector<16xf32>
    %23 = vector.multi_reduction <maximumf>, %22, %cst_16 [1] : vector<16x16xf32> to vector<16xf32>
    %24 = vector.shape_cast %23 : vector<16xf32> to vector<16x1xf32>
    %25 = vector.broadcast %24 : vector<16x1xf32> to vector<16x16xf32>
    %26 = arith.subf %22, %25 : vector<16x16xf32>
    %27 = math.exp %26 : vector<16x16xf32>
    %cst_17 = arith.constant dense<0.000000e+00> : vector<16xf32>
    %28 = vector.multi_reduction <add>, %27, %cst_17 [1] : vector<16x16xf32> to vector<16xf32>
    %29 = vector.shape_cast %28 : vector<16xf32> to vector<16x1xf32>
    %30 = vector.broadcast %29 : vector<16x1xf32> to vector<16x16xf32>
    %31 = arith.divf %27, %30 : vector<16x16xf32>
    %32 = vector.extract_strided_slice %8 {offsets = [0, 0], sizes = [16, 32], strides = [1, 1]} : vector<16x128xf32> to vector<16x32xf32>
    %cst_18 = arith.constant dense<0.000000e+00> : vector<16x32xf32>
    %33 = tpu.matmul %31, %32, %cst_18 {dimension_numbers = #tpu.dot_dimension_numbers<[1], [0], [0], [1], [0, 0, 1, 1], [], []>} : vector<16x16xf32>, vector<16x32xf32>, vector<16x32xf32> -> vector<16x32xf32>
    %c0_19 = arith.constant 0 : index
    %c0_20 = arith.constant 0 : index
    %34 = vector.load %arg19[%c0_19, %c0_20] : memref<16x128xf32, #tpu.memory_space<vmem>>, vector<16x32xf32>
    tpu.vector_store %arg19[%c0_19, %c0_20], %33 {strides = array<i32>} : memref<16x128xf32, #tpu.memory_space<vmem>>, vector<16x32xf32>,
    %35 = vector.extract_strided_slice %10 {offsets = [0, 1], sizes = [16, 1], strides = [1, 1]} : vector<16x4xf32> to vector<16x1xf32>
    %36 = vector.extract_strided_slice %10 {offsets = [0, 3], sizes = [16, 1], strides = [1, 1]} : vector<16x4xf32> to vector<16x1xf32>
    %37 = tpu.transpose %35, [1, 0] : vector<16x1xf32> -> vector<1x16xf32>
    %38 = vector.broadcast %36 : vector<16x1xf32> to vector<16x16xf32>
    %39 = vector.broadcast %37 : vector<1x16xf32> to vector<16x16xf32>
    %40 = arith.addf %38, %39 : vector<16x16xf32>
    %cst_21 = arith.constant 0.000000e+00 : f32
    %41 = vector.broadcast %cst_21 : f32 to vector<16x16xf32>
    %42 = arith.cmpf ogt, %40, %41 : vector<16x16xf32>
    %cst_22 = arith.constant 2.000000e-01 : f32
    %43 = vector.broadcast %cst_22 : f32 to vector<16x16xf32>
    %44 = arith.mulf %43, %40 : vector<16x16xf32>
    %45 = arith.select %42, %40, %44 : vector<16x16xi1>, vector<16x16xf32>
    %46 = arith.addf %45, %5 : vector<16x16xf32>
    %cst_23 = arith.constant dense<0xFF800000> : vector<16xf32>
    %47 = vector.multi_reduction <maximumf>, %46, %cst_23 [1] : vector<16x16xf32> to vector<16xf32>
    %48 = vector.shape_cast %47 : vector<16xf32> to vector<16x1xf32>
    %49 = vector.broadcast %48 : vector<16x1xf32> to vector<16x16xf32>
    %50 = arith.subf %46, %49 : vector<16x16xf32>
    %51 = math.exp %50 : vector<16x16xf32>
    %cst_24 = arith.constant dense<0.000000e+00> : vector<16xf32>
    %52 = vector.multi_reduction <add>, %51, %cst_24 [1] : vector<16x16xf32> to vector<16xf32>
    %53 = vector.shape_cast %52 : vector<16xf32> to vector<16x1xf32>
    %54 = vector.broadcast %53 : vector<16x1xf32> to vector<16x16xf32>
    %55 = arith.divf %51, %54 : vector<16x16xf32>
    %56 = vector.extract_strided_slice %8 {offsets = [0, 32], sizes = [16, 32], strides = [1, 1]} : vector<16x128xf32> to vector<16x32xf32>
    %cst_25 = arith.constant dense<0.000000e+00> : vector<16x32xf32>
    %57 = tpu.matmul %55, %56, %cst_25 {dimension_numbers = #tpu.dot_dimension_numbers<[1], [0], [0], [1], [0, 0, 1, 1], [], []>} : vector<16x16xf32>, vector<16x32xf32>, vector<16x32xf32> -> vector<16x32xf32>
    %c0_26 = arith.constant 0 : index
    %c32 = arith.constant 32 : index
    %58 = vector.load %arg19[%c0_26, %c32] : memref<16x128xf32, #tpu.memory_space<vmem>>, vector<16x32xf32>
    tpu.vector_store %arg19[%c0_26, %c32], %57 {strides = array<i32>} : memref<16x128xf32, #tpu.memory_space<vmem>>, vector<16x32xf32>,
    %c0_27 = arith.constant 0 : index
    %c0_28 = arith.constant 0 : index
    %59 = vector.load %arg19[%c0_27, %c0_28] : memref<16x128xf32, #tpu.memory_space<vmem>>, vector<16x128xf32>
    %c0_29 = arith.constant 0 : index
    %c0_30 = arith.constant 0 : index
    %60 = vector.load %arg6[%c0_29, %c0_30] : memref<1x128xf32, #tpu.memory_space<vmem>>, vector<1x128xf32>
    %61 = vector.broadcast %60 : vector<1x128xf32> to vector<16x128xf32>
    %62 = arith.addf %59, %61 : vector<16x128xf32>
    %cst_31 = arith.constant 0.000000e+00 : f32
    %63 = vector.broadcast %cst_31 : f32 to vector<16x128xf32>
    %64 = arith.cmpf ogt, %62, %63 : vector<16x128xf32>
    %cst_32 = arith.constant 0.000000e+00 : f32
    %65 = vector.broadcast %cst_32 : f32 to vector<16x128xf32>
    %66 = arith.minimumf %62, %65 : vector<16x128xf32>
    %67 = math.exp %66 : vector<16x128xf32>
    %cst_33 = arith.constant 1.000000e+00 : f32
    %68 = vector.broadcast %cst_33 : f32 to vector<16x128xf32>
    %69 = arith.subf %67, %68 : vector<16x128xf32>
    %70 = arith.select %64, %62, %69 : vector<16x128xi1>, vector<16x128xf32>
    %c0_34 = arith.constant 0 : index
    %c0_35 = arith.constant 0 : index
    %71 = vector.load %arg19[%c0_34, %c0_35] : memref<16x128xf32, #tpu.memory_space<vmem>>, vector<16x128xf32>
    tpu.vector_store %arg19[%c0_34, %c0_35], %70 {strides = array<i32>} : memref<16x128xf32, #tpu.memory_space<vmem>>, vector<16x128xf32>,
    %c0_36 = arith.constant 0 : index
    %c0_37 = arith.constant 0 : index
    %72 = vector.load %arg19[%c0_36, %c0_37] : memref<16x128xf32, #tpu.memory_space<vmem>>, vector<16x128xf32>
    %c0_38 = arith.constant 0 : index
    %c0_39 = arith.constant 0 : index
    %73 = vector.load %arg7[%c0_38, %c0_39] : memref<128x128xf32, #tpu.memory_space<vmem>>, vector<128x128xf32>
    %cst_40 = arith.constant dense<0.000000e+00> : vector<16x128xf32>
    %74 = tpu.matmul %72, %73, %cst_40 {dimension_numbers = #tpu.dot_dimension_numbers<[1], [0], [0], [1], [0, 0, 1, 1], [], []>} : vector<16x128xf32>, vector<128x128xf32>, vector<16x128xf32> -> vector<16x128xf32>
    %c0_41 = arith.constant 0 : index
    %c0_42 = arith.constant 0 : index
    %75 = vector.load %arg8[%c0_41, %c0_42] : memref<128x4xf32, #tpu.memory_space<vmem>>, vector<128x4xf32>
    %cst_43 = arith.constant dense<0.000000e+00> : vector<16x4xf32>
    %76 = tpu.matmul %74, %75, %cst_43 {dimension_numbers = #tpu.dot_dimension_numbers<[1], [0], [0], [1], [0, 0, 1, 1], [], []>} : vector<16x128xf32>, vector<128x4xf32>, vector<16x4xf32> -> vector<16x4xf32>
    %77 = vector.extract_strided_slice %76 {offsets = [0, 0], sizes = [16, 1], strides = [1, 1]} : vector<16x4xf32> to vector<16x1xf32>
    %78 = vector.extract_strided_slice %76 {offsets = [0, 2], sizes = [16, 1], strides = [1, 1]} : vector<16x4xf32> to vector<16x1xf32>
    %79 = tpu.transpose %77, [1, 0] : vector<16x1xf32> -> vector<1x16xf32>
    %80 = vector.broadcast %78 : vector<16x1xf32> to vector<16x16xf32>
    %81 = vector.broadcast %79 : vector<1x16xf32> to vector<16x16xf32>
    %82 = arith.addf %80, %81 : vector<16x16xf32>
    %cst_44 = arith.constant 0.000000e+00 : f32
    %83 = vector.broadcast %cst_44 : f32 to vector<16x16xf32>
    %84 = arith.cmpf ogt, %82, %83 : vector<16x16xf32>
    %cst_45 = arith.constant 2.000000e-01 : f32
    %85 = vector.broadcast %cst_45 : f32 to vector<16x16xf32>
    %86 = arith.mulf %85, %82 : vector<16x16xf32>
    %87 = arith.select %84, %82, %86 : vector<16x16xi1>, vector<16x16xf32>
    %88 = arith.addf %87, %5 : vector<16x16xf32>
    %cst_46 = arith.constant dense<0xFF800000> : vector<16xf32>
    %89 = vector.multi_reduction <maximumf>, %88, %cst_46 [1] : vector<16x16xf32> to vector<16xf32>
    %90 = vector.shape_cast %89 : vector<16xf32> to vector<16x1xf32>
    %91 = vector.broadcast %90 : vector<16x1xf32> to vector<16x16xf32>
    %92 = arith.subf %88, %91 : vector<16x16xf32>
    %93 = math.exp %92 : vector<16x16xf32>
    %cst_47 = arith.constant dense<0.000000e+00> : vector<16xf32>
    %94 = vector.multi_reduction <add>, %93, %cst_47 [1] : vector<16x16xf32> to vector<16xf32>
    %95 = vector.shape_cast %94 : vector<16xf32> to vector<16x1xf32>
    %96 = vector.broadcast %95 : vector<16x1xf32> to vector<16x16xf32>
    %97 = arith.divf %93, %96 : vector<16x16xf32>
    %98 = vector.extract_strided_slice %74 {offsets = [0, 0], sizes = [16, 32], strides = [1, 1]} : vector<16x128xf32> to vector<16x32xf32>
    %cst_48 = arith.constant dense<0.000000e+00> : vector<16x32xf32>
    %99 = tpu.matmul %97, %98, %cst_48 {dimension_numbers = #tpu.dot_dimension_numbers<[1], [0], [0], [1], [0, 0, 1, 1], [], []>} : vector<16x16xf32>, vector<16x32xf32>, vector<16x32xf32> -> vector<16x32xf32>
    %c0_49 = arith.constant 0 : index
    %c0_50 = arith.constant 0 : index
    %100 = vector.load %arg20[%c0_49, %c0_50] : memref<16x128xf32, #tpu.memory_space<vmem>>, vector<16x32xf32>
    tpu.vector_store %arg20[%c0_49, %c0_50], %99 {strides = array<i32>} : memref<16x128xf32, #tpu.memory_space<vmem>>, vector<16x32xf32>,
    %101 = vector.extract_strided_slice %76 {offsets = [0, 1], sizes = [16, 1], strides = [1, 1]} : vector<16x4xf32> to vector<16x1xf32>
    %102 = vector.extract_strided_slice %76 {offsets = [0, 3], sizes = [16, 1], strides = [1, 1]} : vector<16x4xf32> to vector<16x1xf32>
    %103 = tpu.transpose %101, [1, 0] : vector<16x1xf32> -> vector<1x16xf32>
    %104 = vector.broadcast %102 : vector<16x1xf32> to vector<16x16xf32>
    %105 = vector.broadcast %103 : vector<1x16xf32> to vector<16x16xf32>
    %106 = arith.addf %104, %105 : vector<16x16xf32>
    %cst_51 = arith.constant 0.000000e+00 : f32
    %107 = vector.broadcast %cst_51 : f32 to vector<16x16xf32>
    %108 = arith.cmpf ogt, %106, %107 : vector<16x16xf32>
    %cst_52 = arith.constant 2.000000e-01 : f32
    %109 = vector.broadcast %cst_52 : f32 to vector<16x16xf32>
    %110 = arith.mulf %109, %106 : vector<16x16xf32>
    %111 = arith.select %108, %106, %110 : vector<16x16xi1>, vector<16x16xf32>
    %112 = arith.addf %111, %5 : vector<16x16xf32>
    %cst_53 = arith.constant dense<0xFF800000> : vector<16xf32>
    %113 = vector.multi_reduction <maximumf>, %112, %cst_53 [1] : vector<16x16xf32> to vector<16xf32>
    %114 = vector.shape_cast %113 : vector<16xf32> to vector<16x1xf32>
    %115 = vector.broadcast %114 : vector<16x1xf32> to vector<16x16xf32>
    %116 = arith.subf %112, %115 : vector<16x16xf32>
    %117 = math.exp %116 : vector<16x16xf32>
    %cst_54 = arith.constant dense<0.000000e+00> : vector<16xf32>
    %118 = vector.multi_reduction <add>, %117, %cst_54 [1] : vector<16x16xf32> to vector<16xf32>
    %119 = vector.shape_cast %118 : vector<16xf32> to vector<16x1xf32>
    %120 = vector.broadcast %119 : vector<16x1xf32> to vector<16x16xf32>
    %121 = arith.divf %117, %120 : vector<16x16xf32>
    %122 = vector.extract_strided_slice %74 {offsets = [0, 32], sizes = [16, 32], strides = [1, 1]} : vector<16x128xf32> to vector<16x32xf32>
    %cst_55 = arith.constant dense<0.000000e+00> : vector<16x32xf32>
    %123 = tpu.matmul %121, %122, %cst_55 {dimension_numbers = #tpu.dot_dimension_numbers<[1], [0], [0], [1], [0, 0, 1, 1], [], []>} : vector<16x16xf32>, vector<16x32xf32>, vector<16x32xf32> -> vector<16x32xf32>
    %c0_56 = arith.constant 0 : index
    %c32_57 = arith.constant 32 : index
    %124 = vector.load %arg20[%c0_56, %c32_57] : memref<16x128xf32, #tpu.memory_space<vmem>>, vector<16x32xf32>
    tpu.vector_store %arg20[%c0_56, %c32_57], %123 {strides = array<i32>} : memref<16x128xf32, #tpu.memory_space<vmem>>, vector<16x32xf32>,
    %c0_58 = arith.constant 0 : index
    %c0_59 = arith.constant 0 : index
    %125 = vector.load %arg20[%c0_58, %c0_59] : memref<16x128xf32, #tpu.memory_space<vmem>>, vector<16x128xf32>
    %c0_60 = arith.constant 0 : index
    %c0_61 = arith.constant 0 : index
    %126 = vector.load %arg9[%c0_60, %c0_61] : memref<1x128xf32, #tpu.memory_space<vmem>>, vector<1x128xf32>
    %127 = vector.broadcast %126 : vector<1x128xf32> to vector<16x128xf32>
    %128 = arith.addf %125, %127 : vector<16x128xf32>
    %cst_62 = arith.constant 0.000000e+00 : f32
    %129 = vector.broadcast %cst_62 : f32 to vector<16x128xf32>
    %130 = arith.cmpf ogt, %128, %129 : vector<16x128xf32>
    %cst_63 = arith.constant 0.000000e+00 : f32
    %131 = vector.broadcast %cst_63 : f32 to vector<16x128xf32>
    %132 = arith.minimumf %128, %131 : vector<16x128xf32>
    %133 = math.exp %132 : vector<16x128xf32>
    %cst_64 = arith.constant 1.000000e+00 : f32
    %134 = vector.broadcast %cst_64 : f32 to vector<16x128xf32>
    %135 = arith.subf %133, %134 : vector<16x128xf32>
    %136 = arith.select %130, %128, %135 : vector<16x128xi1>, vector<16x128xf32>
    %c0_65 = arith.constant 0 : index
    %c0_66 = arith.constant 0 : index
    %137 = vector.load %arg20[%c0_65, %c0_66] : memref<16x128xf32, #tpu.memory_space<vmem>>, vector<16x128xf32>
    tpu.vector_store %arg20[%c0_65, %c0_66], %136 {strides = array<i32>} : memref<16x128xf32, #tpu.memory_space<vmem>>, vector<16x128xf32>,
    %c0_67 = arith.constant 0 : index
    %c0_68 = arith.constant 0 : index
    %138 = vector.load %arg20[%c0_67, %c0_68] : memref<16x128xf32, #tpu.memory_space<vmem>>, vector<16x128xf32>
    %c0_69 = arith.constant 0 : index
    %c0_70 = arith.constant 0 : index
    %139 = vector.load %arg10[%c0_69, %c0_70] : memref<128x128xf32, #tpu.memory_space<vmem>>, vector<128x128xf32>
    %cst_71 = arith.constant dense<0.000000e+00> : vector<16x128xf32>
    %140 = tpu.matmul %138, %139, %cst_71 {dimension_numbers = #tpu.dot_dimension_numbers<[1], [0], [0], [1], [0, 0, 1, 1], [], []>} : vector<16x128xf32>, vector<128x128xf32>, vector<16x128xf32> -> vector<16x128xf32>
    %c0_72 = arith.constant 0 : index
    %c0_73 = arith.constant 0 : index
    %141 = vector.load %arg11[%c0_72, %c0_73] : memref<128x4xf32, #tpu.memory_space<vmem>>, vector<128x4xf32>
    %cst_74 = arith.constant dense<0.000000e+00> : vector<16x4xf32>
    %142 = tpu.matmul %140, %141, %cst_74 {dimension_numbers = #tpu.dot_dimension_numbers<[1], [0], [0], [1], [0, 0, 1, 1], [], []>} : vector<16x128xf32>, vector<128x4xf32>, vector<16x4xf32> -> vector<16x4xf32>
    %143 = vector.extract_strided_slice %142 {offsets = [0, 0], sizes = [16, 1], strides = [1, 1]} : vector<16x4xf32> to vector<16x1xf32>
    %144 = vector.extract_strided_slice %142 {offsets = [0, 2], sizes = [16, 1], strides = [1, 1]} : vector<16x4xf32> to vector<16x1xf32>
    %145 = tpu.transpose %143, [1, 0] : vector<16x1xf32> -> vector<1x16xf32>
    %146 = vector.broadcast %144 : vector<16x1xf32> to vector<16x16xf32>
    %147 = vector.broadcast %145 : vector<1x16xf32> to vector<16x16xf32>
    %148 = arith.addf %146, %147 : vector<16x16xf32>
    %cst_75 = arith.constant 0.000000e+00 : f32
    %149 = vector.broadcast %cst_75 : f32 to vector<16x16xf32>
    %150 = arith.cmpf ogt, %148, %149 : vector<16x16xf32>
    %cst_76 = arith.constant 2.000000e-01 : f32
    %151 = vector.broadcast %cst_76 : f32 to vector<16x16xf32>
    %152 = arith.mulf %151, %148 : vector<16x16xf32>
    %153 = arith.select %150, %148, %152 : vector<16x16xi1>, vector<16x16xf32>
    %154 = arith.addf %153, %5 : vector<16x16xf32>
    %cst_77 = arith.constant dense<0xFF800000> : vector<16xf32>
    %155 = vector.multi_reduction <maximumf>, %154, %cst_77 [1] : vector<16x16xf32> to vector<16xf32>
    %156 = vector.shape_cast %155 : vector<16xf32> to vector<16x1xf32>
    %157 = vector.broadcast %156 : vector<16x1xf32> to vector<16x16xf32>
    %158 = arith.subf %154, %157 : vector<16x16xf32>
    %159 = math.exp %158 : vector<16x16xf32>
    %cst_78 = arith.constant dense<0.000000e+00> : vector<16xf32>
    %160 = vector.multi_reduction <add>, %159, %cst_78 [1] : vector<16x16xf32> to vector<16xf32>
    %161 = vector.shape_cast %160 : vector<16xf32> to vector<16x1xf32>
    %162 = vector.broadcast %161 : vector<16x1xf32> to vector<16x16xf32>
    %163 = arith.divf %159, %162 : vector<16x16xf32>
    %164 = vector.extract_strided_slice %140 {offsets = [0, 0], sizes = [16, 32], strides = [1, 1]} : vector<16x128xf32> to vector<16x32xf32>
    %cst_79 = arith.constant dense<0.000000e+00> : vector<16x32xf32>
    %165 = tpu.matmul %163, %164, %cst_79 {dimension_numbers = #tpu.dot_dimension_numbers<[1], [0], [0], [1], [0, 0, 1, 1], [], []>} : vector<16x16xf32>, vector<16x32xf32>, vector<16x32xf32> -> vector<16x32xf32>
    %c0_80 = arith.constant 0 : index
    %c0_81 = arith.constant 0 : index
    %166 = vector.load %arg19[%c0_80, %c0_81] : memref<16x128xf32, #tpu.memory_space<vmem>>, vector<16x32xf32>
    tpu.vector_store %arg19[%c0_80, %c0_81], %165 {strides = array<i32>} : memref<16x128xf32, #tpu.memory_space<vmem>>, vector<16x32xf32>,
    %167 = vector.extract_strided_slice %142 {offsets = [0, 1], sizes = [16, 1], strides = [1, 1]} : vector<16x4xf32> to vector<16x1xf32>
    %168 = vector.extract_strided_slice %142 {offsets = [0, 3], sizes = [16, 1], strides = [1, 1]} : vector<16x4xf32> to vector<16x1xf32>
    %169 = tpu.transpose %167, [1, 0] : vector<16x1xf32> -> vector<1x16xf32>
    %170 = vector.broadcast %168 : vector<16x1xf32> to vector<16x16xf32>
    %171 = vector.broadcast %169 : vector<1x16xf32> to vector<16x16xf32>
    %172 = arith.addf %170, %171 : vector<16x16xf32>
    %cst_82 = arith.constant 0.000000e+00 : f32
    %173 = vector.broadcast %cst_82 : f32 to vector<16x16xf32>
    %174 = arith.cmpf ogt, %172, %173 : vector<16x16xf32>
    %cst_83 = arith.constant 2.000000e-01 : f32
    %175 = vector.broadcast %cst_83 : f32 to vector<16x16xf32>
    %176 = arith.mulf %175, %172 : vector<16x16xf32>
    %177 = arith.select %174, %172, %176 : vector<16x16xi1>, vector<16x16xf32>
    %178 = arith.addf %177, %5 : vector<16x16xf32>
    %cst_84 = arith.constant dense<0xFF800000> : vector<16xf32>
    %179 = vector.multi_reduction <maximumf>, %178, %cst_84 [1] : vector<16x16xf32> to vector<16xf32>
    %180 = vector.shape_cast %179 : vector<16xf32> to vector<16x1xf32>
    %181 = vector.broadcast %180 : vector<16x1xf32> to vector<16x16xf32>
    %182 = arith.subf %178, %181 : vector<16x16xf32>
    %183 = math.exp %182 : vector<16x16xf32>
    %cst_85 = arith.constant dense<0.000000e+00> : vector<16xf32>
    %184 = vector.multi_reduction <add>, %183, %cst_85 [1] : vector<16x16xf32> to vector<16xf32>
    %185 = vector.shape_cast %184 : vector<16xf32> to vector<16x1xf32>
    %186 = vector.broadcast %185 : vector<16x1xf32> to vector<16x16xf32>
    %187 = arith.divf %183, %186 : vector<16x16xf32>
    %188 = vector.extract_strided_slice %140 {offsets = [0, 32], sizes = [16, 32], strides = [1, 1]} : vector<16x128xf32> to vector<16x32xf32>
    %cst_86 = arith.constant dense<0.000000e+00> : vector<16x32xf32>
    %189 = tpu.matmul %187, %188, %cst_86 {dimension_numbers = #tpu.dot_dimension_numbers<[1], [0], [0], [1], [0, 0, 1, 1], [], []>} : vector<16x16xf32>, vector<16x32xf32>, vector<16x32xf32> -> vector<16x32xf32>
    %c0_87 = arith.constant 0 : index
    %c32_88 = arith.constant 32 : index
    %190 = vector.load %arg19[%c0_87, %c32_88] : memref<16x128xf32, #tpu.memory_space<vmem>>, vector<16x32xf32>
    tpu.vector_store %arg19[%c0_87, %c32_88], %189 {strides = array<i32>} : memref<16x128xf32, #tpu.memory_space<vmem>>, vector<16x32xf32>,
    %c0_89 = arith.constant 0 : index
    %c0_90 = arith.constant 0 : index
    %191 = vector.load %arg19[%c0_89, %c0_90] : memref<16x128xf32, #tpu.memory_space<vmem>>, vector<16x128xf32>
    %c0_91 = arith.constant 0 : index
    %c0_92 = arith.constant 0 : index
    %192 = vector.load %arg12[%c0_91, %c0_92] : memref<1x128xf32, #tpu.memory_space<vmem>>, vector<1x128xf32>
    %193 = vector.broadcast %192 : vector<1x128xf32> to vector<16x128xf32>
    %194 = arith.addf %191, %193 : vector<16x128xf32>
    %cst_93 = arith.constant 0.000000e+00 : f32
    %195 = vector.broadcast %cst_93 : f32 to vector<16x128xf32>
    %196 = arith.cmpf ogt, %194, %195 : vector<16x128xf32>
    %cst_94 = arith.constant 0.000000e+00 : f32
    %197 = vector.broadcast %cst_94 : f32 to vector<16x128xf32>
    %198 = arith.minimumf %194, %197 : vector<16x128xf32>
    %199 = math.exp %198 : vector<16x128xf32>
    %cst_95 = arith.constant 1.000000e+00 : f32
    %200 = vector.broadcast %cst_95 : f32 to vector<16x128xf32>
    %201 = arith.subf %199, %200 : vector<16x128xf32>
    %202 = arith.select %196, %194, %201 : vector<16x128xi1>, vector<16x128xf32>
    %c0_96 = arith.constant 0 : index
    %c0_97 = arith.constant 0 : index
    %203 = vector.load %arg19[%c0_96, %c0_97] : memref<16x128xf32, #tpu.memory_space<vmem>>, vector<16x128xf32>
    tpu.vector_store %arg19[%c0_96, %c0_97], %202 {strides = array<i32>} : memref<16x128xf32, #tpu.memory_space<vmem>>, vector<16x128xf32>,
    %c0_98 = arith.constant 0 : index
    %c0_99 = arith.constant 0 : index
    %204 = vector.load %arg2[%c0_98, %c0_99] : memref<2x16xf32, #tpu.memory_space<vmem>>, vector<2x16xf32>
    %c0_100 = arith.constant 0 : index
    %c0_101 = arith.constant 0 : index
    %205 = vector.load %arg19[%c0_100, %c0_101] : memref<16x128xf32, #tpu.memory_space<vmem>>, vector<16x128xf32>
    %cst_102 = arith.constant dense<0.000000e+00> : vector<2x128xf32>
    %206 = tpu.matmul %204, %205, %cst_102 {dimension_numbers = #tpu.dot_dimension_numbers<[1], [0], [0], [1], [0, 0, 1, 1], [], []>} : vector<2x16xf32>, vector<16x128xf32>, vector<2x128xf32> -> vector<2x128xf32>
    %c0_103 = arith.constant 0 : index
    %c0_104 = arith.constant 0 : index
    %207 = vector.load %arg13[%c0_103, %c0_104] : memref<128x32xf32, #tpu.memory_space<vmem>>, vector<128x32xf32>
    %cst_105 = arith.constant dense<0.000000e+00> : vector<2x32xf32>
    %208 = tpu.matmul %206, %207, %cst_105 {dimension_numbers = #tpu.dot_dimension_numbers<[1], [0], [0], [1], [0, 0, 1, 1], [], []>} : vector<2x128xf32>, vector<128x32xf32>, vector<2x32xf32> -> vector<2x32xf32>
    %c0_106 = arith.constant 0 : index
    %c0_107 = arith.constant 0 : index
    %209 = vector.load %arg3[%c0_106, %c0_107] : memref<2x6xf32, #tpu.memory_space<vmem>>, vector<2x6xf32>
    %c0_108 = arith.constant 0 : index
    %c0_109 = arith.constant 0 : index
    %210 = vector.load %arg14[%c0_108, %c0_109] : memref<6x32xf32, #tpu.memory_space<vmem>>, vector<6x32xf32>
    %cst_110 = arith.constant dense<0.000000e+00> : vector<2x32xf32>
    %211 = tpu.matmul %209, %210, %cst_110 {dimension_numbers = #tpu.dot_dimension_numbers<[1], [0], [0], [1], [0, 0, 1, 1], [], []>} : vector<2x6xf32>, vector<6x32xf32>, vector<2x32xf32> -> vector<2x32xf32>
    %212 = arith.addf %208, %211 : vector<2x32xf32>
    %c0_111 = arith.constant 0 : index
    %c0_112 = arith.constant 0 : index
    %213 = vector.load %arg15[%c0_111, %c0_112] : memref<1x32xf32, #tpu.memory_space<vmem>>, vector<1x32xf32>
    %214 = vector.broadcast %213 : vector<1x32xf32> to vector<2x32xf32>
    %215 = arith.addf %212, %214 : vector<2x32xf32>
    %cst_113 = arith.constant 0.000000e+00 : f32
    %216 = vector.broadcast %cst_113 : f32 to vector<2x32xf32>
    %217 = arith.maximumf %215, %216 : vector<2x32xf32>
    %c0_114 = arith.constant 0 : index
    %c0_115 = arith.constant 0 : index
    %218 = vector.load %arg16[%c0_114, %c0_115] : memref<32x4xf32, #tpu.memory_space<vmem>>, vector<32x4xf32>
    %cst_116 = arith.constant dense<0.000000e+00> : vector<2x4xf32>
    %219 = tpu.matmul %217, %218, %cst_116 {dimension_numbers = #tpu.dot_dimension_numbers<[1], [0], [0], [1], [0, 0, 1, 1], [], []>} : vector<2x32xf32>, vector<32x4xf32>, vector<2x4xf32> -> vector<2x4xf32>
    %c0_117 = arith.constant 0 : index
    %c0_118 = arith.constant 0 : index
    %220 = vector.load %arg17[%c0_117, %c0_118] : memref<1x4xf32, #tpu.memory_space<vmem>>, vector<1x4xf32>
    %221 = vector.broadcast %220 : vector<1x4xf32> to vector<2x4xf32>
    %222 = arith.addf %219, %221 : vector<2x4xf32>
    %c0_119 = arith.constant 0 : index
    %c0_120 = arith.constant 0 : index
    %223 = vector.load %arg18[%c0_119, %c0_120] : memref<2x4xf32, #tpu.memory_space<vmem>>, vector<2x4xf32>
    tpu.vector_store %arg18[%c0_119, %c0_120], %222 {strides = array<i32>} : memref<2x4xf32, #tpu.memory_space<vmem>>, vector<2x4xf32>,
    return
  }
}

</mosaic_0001>

<llo_original>
// kernel: tpu_custom_call.1
$region0: #{tpu_custom_call.1}
  #allocation0 [shape = 'u32[]', space=smem, size = 0x4, offset = 0x4, fixed_abs, tag = 'smem constant byte address 0x4 - core index']
  #allocation1 [shape = 'u32[144,128]{1,0:T(1,128)}', space=vmem, size = 0x12000, scoped, tag = 'internal scratch']
  #allocation2 [shape = 'f32[16,128]{1,0:T(8,128)}', space=vmem, size = 0x2000, scoped, tag = 'scratch operand']
  #allocation3 [shape = 'f32[16,128]{1,0:T(8,128)}', space=vmem, size = 0x2000, scoped, tag = 'scratch operand']
  %s0 = inlined_call_operand.vmem [shape: f32[16,8], index: 0, kind: input, shape index: {}]
  %s1 = inlined_call_operand.vmem [shape: bf16[16,16], index: 1, kind: input, shape index: {}]
  %s2 = inlined_call_operand.vmem [shape: f32[2,16], index: 2, kind: input, shape index: {}]
  %s3 = inlined_call_operand.vmem [shape: f32[2,6], index: 3, kind: input, shape index: {}]
  %s4 = inlined_call_operand.vmem [shape: f32[8,128], index: 4, kind: input, shape index: {}]
  %s5 = inlined_call_operand.vmem [shape: f32[128,4], index: 5, kind: input, shape index: {}]
  %s6 = inlined_call_operand.vmem [shape: f32[1,128], index: 6, kind: input, shape index: {}]
  %s7 = inlined_call_operand.vmem [shape: f32[128,128], index: 7, kind: input, shape index: {}]
  %s8 = inlined_call_operand.vmem [shape: f32[128,4], index: 8, kind: input, shape index: {}]
  %s9 = inlined_call_operand.vmem [shape: f32[1,128], index: 9, kind: input, shape index: {}]
  %s10 = inlined_call_operand.vmem [shape: f32[128,128], index: 10, kind: input, shape index: {}]
  %s11 = inlined_call_operand.vmem [shape: f32[128,4], index: 11, kind: input, shape index: {}]
  %s12 = inlined_call_operand.vmem [shape: f32[1,128], index: 12, kind: input, shape index: {}]
  %s13 = inlined_call_operand.vmem [shape: f32[128,32], index: 13, kind: input, shape index: {}]
  %s14 = inlined_call_operand.vmem [shape: f32[6,32], index: 14, kind: input, shape index: {}]
  %s15 = inlined_call_operand.vmem [shape: f32[1,32], index: 15, kind: input, shape index: {}]
  %s16 = inlined_call_operand.vmem [shape: f32[32,4], index: 16, kind: input, shape index: {}]
  %s17 = inlined_call_operand.vmem [shape: f32[1,4], index: 17, kind: input, shape index: {}]
  %s18 = inlined_call_operand.hbm [shape: f32[2,4], index: 18, kind: output, shape index: {}]
  %s19 = sld [smem:[#allocation0]]
  $region82: #{tpu_custom_call.1} parent=0
    _
  %s21 = ssub.s32 1, %s19
  %s22 = scalar_select 0, %s21, %s19
  $region1: #{tpu_custom_call.1} parent=0
    #allocation4 [shape = 'u8[1024]{0}', space=vmem, size = 0x400, scoped, tag = 'output window, operand 0, single buffered']
    #allocation5 [shape = 's32[1]{0}', space=sflag, size = 0x4, scoped, tag = 'scoped memory for tpu_custom_call.1']
    %23 = vsyncpa [#allocation5], 0
    // Predicated region
    $region2: #{tpu_custom_call.1} parent=1 // pred_check
      _
    $region3: #{tpu_custom_call.1} parent=1 // pred_check_branch
      %25 = sbr.rel (0) target = $region5
    $region4: #{tpu_custom_call.1} parent=1 // pred_region
      _
    $region5: #{tpu_custom_call.1} parent=1 // pred_fallthru
      _
    // Predicated region
    $region6: #{tpu_custom_call.1} parent=1 // pred_check
      _
    $region7: #{tpu_custom_call.1} parent=1 // pred_check_branch
      %27 = sbr.rel (0) target = $region9
    $region8: #{tpu_custom_call.1} parent=1 // pred_region
      _
    $region9: #{tpu_custom_call.1} parent=1 // pred_fallthru
      _
    // Predicated region
    $region10: #{tpu_custom_call.1} parent=1 // pred_check
      _
    $region11: #{tpu_custom_call.1} parent=1 // pred_check_branch
      %29 = sbr.rel (0) target = $region13
    $region12: #{tpu_custom_call.1} parent=1 // pred_region
      _
    $region13: #{tpu_custom_call.1} parent=1 // pred_fallthru
      _
    // Predicated region
    $region14: #{tpu_custom_call.1} parent=1 // pred_check
      _
    $region15: #{tpu_custom_call.1} parent=1 // pred_check_branch
      %31 = sbr.rel (0) target = $region17
    $region16: #{tpu_custom_call.1} parent=1 // pred_region
      _
    $region17: #{tpu_custom_call.1} parent=1 // pred_fallthru
      _
    // Predicated region
    $region18: #{tpu_custom_call.1} parent=1 // pred_check
      _
    $region19: #{tpu_custom_call.1} parent=1 // pred_check_branch
      %33 = sbr.rel (0) target = $region21
    $region20: #{tpu_custom_call.1} parent=1 // pred_region
      _
    $region21: #{tpu_custom_call.1} parent=1 // pred_fallthru
      _
    // Predicated region
    $region22: #{tpu_custom_call.1} parent=1 // pred_check
      _
    $region23: #{tpu_custom_call.1} parent=1 // pred_check_branch
      %35 = sbr.rel (0) target = $region25
    $region24: #{tpu_custom_call.1} parent=1 // pred_region
      _
    $region25: #{tpu_custom_call.1} parent=1 // pred_fallthru
      _
    // Predicated region
    $region26: #{tpu_custom_call.1} parent=1 // pred_check
      _
    $region27: #{tpu_custom_call.1} parent=1 // pred_check_branch
      %37 = sbr.rel (0) target = $region29
    $region28: #{tpu_custom_call.1} parent=1 // pred_region
      _
    $region29: #{tpu_custom_call.1} parent=1 // pred_fallthru
      _
    // Predicated region
    $region30: #{tpu_custom_call.1} parent=1 // pred_check
      _
    $region31: #{tpu_custom_call.1} parent=1 // pred_check_branch
      %39 = sbr.rel (0) target = $region33
    $region32: #{tpu_custom_call.1} parent=1 // pred_region
      _
    $region33: #{tpu_custom_call.1} parent=1 // pred_fallthru
      _
    // Predicated region
    $region34: #{tpu_custom_call.1} parent=1 // pred_check
      _
    $region35: #{tpu_custom_call.1} parent=1 // pred_check_branch
      %41 = sbr.rel (0) target = $region37
    $region36: #{tpu_custom_call.1} parent=1 // pred_region
      _
    $region37: #{tpu_custom_call.1} parent=1 // pred_fallthru
      _
    // Predicated region
    $region38: #{tpu_custom_call.1} parent=1 // pred_check
      _
    $region39: #{tpu_custom_call.1} parent=1 // pred_check_branch
      %43 = sbr.rel (0) target = $region41
    $region40: #{tpu_custom_call.1} parent=1 // pred_region
      _
    $region41: #{tpu_custom_call.1} parent=1 // pred_fallthru
      _
    // Predicated region
    $region42: #{tpu_custom_call.1} parent=1 // pred_check
      _
    $region43: #{tpu_custom_call.1} parent=1 // pred_check_branch
      %45 = sbr.rel (0) target = $region45
    $region44: #{tpu_custom_call.1} parent=1 // pred_region
      _
    $region45: #{tpu_custom_call.1} parent=1 // pred_fallthru
      _
    // Predicated region
    $region46: #{tpu_custom_call.1} parent=1 // pred_check
      _
    $region47: #{tpu_custom_call.1} parent=1 // pred_check_branch
      %47 = sbr.rel (0) target = $region49
    $region48: #{tpu_custom_call.1} parent=1 // pred_region
      _
    $region49: #{tpu_custom_call.1} parent=1 // pred_fallthru
      _
    // Predicated region
    $region50: #{tpu_custom_call.1} parent=1 // pred_check
      _
    $region51: #{tpu_custom_call.1} parent=1 // pred_check_branch
      %49 = sbr.rel (0) target = $region53
    $region52: #{tpu_custom_call.1} parent=1 // pred_region
      _
    $region53: #{tpu_custom_call.1} parent=1 // pred_fallthru
      _
    // Predicated region
    $region54: #{tpu_custom_call.1} parent=1 // pred_check
      _
    $region55: #{tpu_custom_call.1} parent=1 // pred_check_branch
      %51 = sbr.rel (0) target = $region57
    $region56: #{tpu_custom_call.1} parent=1 // pred_region
      _
    $region57: #{tpu_custom_call.1} parent=1 // pred_fallthru
      _
    // Predicated region
    $region58: #{tpu_custom_call.1} parent=1 // pred_check
      _
    $region59: #{tpu_custom_call.1} parent=1 // pred_check_branch
      %53 = sbr.rel (0) target = $region61
    $region60: #{tpu_custom_call.1} parent=1 // pred_region
      _
    $region61: #{tpu_custom_call.1} parent=1 // pred_fallthru
      _
    // Predicated region
    $region62: #{tpu_custom_call.1} parent=1 // pred_check
      _
    $region63: #{tpu_custom_call.1} parent=1 // pred_check_branch
      %55 = sbr.rel (0) target = $region65
    $region64: #{tpu_custom_call.1} parent=1 // pred_region
      _
    $region65: #{tpu_custom_call.1} parent=1 // pred_fallthru
      _
    // Predicated region
    $region66: #{tpu_custom_call.1} parent=1 // pred_check
      _
    $region67: #{tpu_custom_call.1} parent=1 // pred_check_branch
      %57 = sbr.rel (0) target = $region69
    $region68: #{tpu_custom_call.1} parent=1 // pred_region
      _
    $region69: #{tpu_custom_call.1} parent=1 // pred_fallthru
      _
    // Predicated region
    $region70: #{tpu_custom_call.1} parent=1 // pred_check
      _
    $region71: #{tpu_custom_call.1} parent=1 // pred_check_branch
      %59 = sbr.rel (0) target = $region73
    $region72: #{tpu_custom_call.1} parent=1 // pred_region
      _
    $region73: #{tpu_custom_call.1} parent=1 // pred_fallthru
      _
    %60 = vst [vmem:[#allocation2] sm:$0xff] 0.0
    %61 = vst [vmem:[#allocation2 + $0x8] sm:$0xff] 0.0
    %62 = vst [vmem:[#allocation3] sm:$0xff] 0.0
    %63 = vst [vmem:[#allocation3 + $0x8] sm:$0xff] 0.0
    %v64 = vld [vmem:[%s1] sm:$0xf]
    %v65 = vld [vmem:[%s1 + $0x4] sm:$0xf]
    %v66 = vunpack.c.l.bf16 %v64
    %v67 = vunpack.c.l.bf16 %v65
    %v68 = vld [vmem:[%s0] sm:$0xff]
    %v69 = vld [vmem:[%s0 + $0x8] sm:$0xff]
    %v70 = vld [vmem:[%s4] sm:$0xff]
    %vm71 = vcmask 64512
    %v73 = vsel %vm71, %v68, 0
    %v76 = vsel %vm71, %v69, 0
    %78 = vmatprep.subr.mxu0 0.0
    %79 = vmatpush1.msra.mxu0 %v70
    %80 = vmatprep.subr.mxu0 0.0
    %81 = vmatpush1.msra.mxu0 0.0
    %82 = vmatprep.subr.mxu0 0.0
    %83 = vmatpush1.msra.mxu0 0.0
    %84 = vmatprep.subr.mxu0 0.0
    %85 = vmatpush1.msra.mxu0 0.0
    %86 = vmatprep.subr.mxu0 0.0
    %87 = vmatpush1.msra.mxu0 0.0
    %88 = vmatprep.subr.mxu0 0.0
    %89 = vmatpush1.msra.mxu0 0.0
    %90 = vmatprep.subr.mxu0 0.0
    %91 = vmatpush1.msra.mxu0 0.0
    %92 = vmatprep.subr.mxu0 0.0
    %93 = vmatpush1.msra.mxu0 0.0
    %94 = vmatprep.subr.mxu0 0.0
    %95 = vmatpush1.msra.mxu0 0.0
    %96 = vmatprep.subr.mxu0 0.0
    %97 = vmatpush1.msra.mxu0 0.0
    %98 = vmatprep.subr.mxu0 0.0
    %99 = vmatpush1.msra.mxu0 0.0
    %100 = vmatprep.subr.mxu0 0.0
    %101 = vmatpush1.msra.mxu0 0.0
    %102 = vmatprep.subr.mxu0 0.0
    %103 = vmatpush1.msra.mxu0 0.0
    %104 = vmatprep.subr.mxu0 0.0
    %105 = vmatpush1.msra.mxu0 0.0
    %106 = vmatprep.subr.mxu0 0.0
    %107 = vmatpush1.msra.mxu0 0.0
    %108 = vmatprep.subr.mxu0 0.0
    %109 = vmatpush1.msra.mxu0 0.0
    %110 = vmatprep.subr.mxu0 0.0
    %111 = vmatpush1.msra.mxu0 0.0
    %112 = vmatprep.subr.mxu0 0.0
    %113 = vmatpush1.msra.mxu0 0.0
    %114 = vmatprep.subr.mxu0 0.0
    %115 = vmatpush1.msra.mxu0 0.0
    %116 = vmatprep.subr.mxu0 0.0
    %117 = vmatpush1.msra.mxu0 0.0
    %118 = vmatprep.subr.mxu0 0.0
    %119 = vmatpush1.msra.mxu0 0.0
    %120 = vmatprep.subr.mxu0 0.0
    %121 = vmatpush1.msra.mxu0 0.0
    %122 = vmatprep.subr.mxu0 0.0
    %123 = vmatpush1.msra.mxu0 0.0
    %124 = vmatprep.subr.mxu0 0.0
    %125 = vmatpush1.msra.mxu0 0.0
    %126 = vmatprep.subr.mxu0 0.0
    %127 = vmatpush1.msra.mxu0 0.0
    %128 = vmatprep.subr.mxu0 0.0
    %129 = vmatpush1.msra.mxu0 0.0
    %130 = vmatprep.subr.mxu0 0.0
    %131 = vmatpush1.msra.mxu0 0.0
    %132 = vmatprep.subr.mxu0 0.0
    %133 = vmatpush1.msra.mxu0 0.0
    %134 = vmatprep.subr.mxu0 0.0
    %135 = vmatpush1.msra.mxu0 0.0
    %136 = vmatprep.subr.mxu0 0.0
    %137 = vmatpush1.msra.mxu0 0.0
    %138 = vmatprep.subr.mxu0 0.0
    %139 = vmatpush1.msra.mxu0 0.0
    %140 = vmatprep.subr.mxu0 0.0
    %141 = vmatpush1.msra.mxu0 0.0
    %142 = vmatprep.mubr.f32.mxu0 0.0
    %143 = vmatmul.mubr.f32.gmra.mrb[0].mxu0 %v73
    %v144 = vpop.f32.mrb[0].mxu0
    %v145 = vadd.f32 0.0, %v144
    %v146 = vpop.f32.mrb[0].mxu0
    %147 = vmatprep.mubr.f32.mxu0 0.0
    %148 = vmatmul.mubr.f32.gmra.mrb[0].mxu0 %v76
    %v149 = vpop.f32.mrb[0].mxu0
    %v150 = vadd.f32 0.0, %v149
    %v151 = vpop.f32.mrb[0].mxu0
    %152 = vdwg.mxu0
    %v153 = vld [vmem:[%s5] sm:$0xff]
    %v154 = vld [vmem:[%s5 + $0x8] sm:$0xff]
    %v155 = vld [vmem:[%s5 + $0x10] sm:$0xff]
    %v156 = vld [vmem:[%s5 + $0x18] sm:$0xff]
    %v157 = vld [vmem:[%s5 + $0x20] sm:$0xff]
    %v158 = vld [vmem:[%s5 + $0x28] sm:$0xff]
    %v159 = vld [vmem:[%s5 + $0x30] sm:$0xff]
    %v160 = vld [vmem:[%s5 + $0x38] sm:$0xff]
    %v161 = vld [vmem:[%s5 + $0x40] sm:$0xff]
    %v162 = vld [vmem:[%s5 + $0x48] sm:$0xff]
    %v163 = vld [vmem:[%s5 + $0x50] sm:$0xff]
    %v164 = vld [vmem:[%s5 + $0x58] sm:$0xff]
    %v165 = vld [vmem:[%s5 + $0x60] sm:$0xff]
    %v166 = vld [vmem:[%s5 + $0x68] sm:$0xff]
    %v167 = vld [vmem:[%s5 + $0x70] sm:$0xff]
    %v168 = vld [vmem:[%s5 + $0x78] sm:$0xff]
    %169 = vmatprep.subr.mxu0 0.0
    %170 = vmatpush1.msra.mxu0 %v153
    %171 = vmatprep.subr.mxu0 0.0
    %172 = vmatpush1.msra.mxu0 %v154
    %173 = vmatprep.subr.mxu0 0.0
    %174 = vmatpush1.msra.mxu0 %v155
    %175 = vmatprep.subr.mxu0 0.0
    %176 = vmatpush1.msra.mxu0 %v156
    %177 = vmatprep.subr.mxu0 0.0
    %178 = vmatpush1.msra.mxu0 %v157
    %179 = vmatprep.subr.mxu0 0.0
    %180 = vmatpush1.msra.mxu0 %v158
    %181 = vmatprep.subr.mxu0 0.0
    %182 = vmatpush1.msra.mxu0 %v159
    %183 = vmatprep.subr.mxu0 0.0
    %184 = vmatpush1.msra.mxu0 %v160
    %185 = vmatprep.subr.mxu0 0.0
    %186 = vmatpush1.msra.mxu0 %v161
    %187 = vmatprep.subr.mxu0 0.0
    %188 = vmatpush1.msra.mxu0 %v162
    %189 = vmatprep.subr.mxu0 0.0
    %190 = vmatpush1.msra.mxu0 %v163
    %191 = vmatprep.subr.mxu0 0.0
    %192 = vmatpush1.msra.mxu0 %v164
    %193 = vmatprep.subr.mxu0 0.0
    %194 = vmatpush1.msra.mxu0 %v165
    %195 = vmatprep.subr.mxu0 0.0
    %196 = vmatpush1.msra.mxu0 %v166
    %197 = vmatprep.subr.mxu0 0.0
    %198 = vmatpush1.msra.mxu0 %v167
    %199 = vmatprep.subr.mxu0 0.0
    %200 = vmatpush1.msra.mxu0 %v168
    %201 = vmatprep.subr.mxu0 0.0
    %202 = vmatpush1.msra.mxu0 0.0
    %203 = vmatprep.subr.mxu0 0.0
    %204 = vmatpush1.msra.mxu0 0.0
    %205 = vmatprep.subr.mxu0 0.0
    %206 = vmatpush1.msra.mxu0 0.0
    %207 = vmatprep.subr.mxu0 0.0
    %208 = vmatpush1.msra.mxu0 0.0
    %209 = vmatprep.subr.mxu0 0.0
    %210 = vmatpush1.msra.mxu0 0.0
    %211 = vmatprep.subr.mxu0 0.0
    %212 = vmatpush1.msra.mxu0 0.0
    %213 = vmatprep.subr.mxu0 0.0
    %214 = vmatpush1.msra.mxu0 0.0
    %215 = vmatprep.subr.mxu0 0.0
    %216 = vmatpush1.msra.mxu0 0.0
    %217 = vmatprep.subr.mxu0 0.0
    %218 = vmatpush1.msra.mxu0 0.0
    %219 = vmatprep.subr.mxu0 0.0
    %220 = vmatpush1.msra.mxu0 0.0
    %221 = vmatprep.subr.mxu0 0.0
    %222 = vmatpush1.msra.mxu0 0.0
    %223 = vmatprep.subr.mxu0 0.0
    %224 = vmatpush1.msra.mxu0 0.0
    %225 = vmatprep.subr.mxu0 0.0
    %226 = vmatpush1.msra.mxu0 0.0
    %227 = vmatprep.subr.mxu0 0.0
    %228 = vmatpush1.msra.mxu0 0.0
    %229 = vmatprep.subr.mxu0 0.0
    %230 = vmatpush1.msra.mxu0 0.0
    %231 = vmatprep.subr.mxu0 0.0
    %232 = vmatpush1.msra.mxu0 0.0
    %233 = vmatprep.mubr.f32.mxu0 0.0
    %234 = vmatmul.mubr.f32.gmra.mrb[0].mxu0 %v145
    %v235 = vpop.f32.mrb[0].mxu0
    %v236 = vadd.f32 0.0, %v235
    %v237 = vpop.f32.mrb[0].mxu0
    %238 = vmatprep.mubr.f32.mxu0 0.0
    %239 = vmatmul.mubr.f32.gmra.mrb[0].mxu0 %v150
    %v240 = vpop.f32.mrb[0].mxu0
    %v241 = vadd.f32 0.0, %v240
    %v242 = vpop.f32.mrb[0].mxu0
    %243 = vdwg.mxu0
    %244 = vxpose.xlu0.b32.start [1/16] %v236, 128
    %245 = vxpose.xlu0.b32.cont [2/16] %v241, 128
    %246 = vxpose.xlu0.b32.cont [3/16] 0.0, 128
    %247 = vxpose.xlu0.b32.cont [4/16] 0.0, 128
    %248 = vxpose.xlu0.b32.cont [5/16] 0.0, 128
    %249 = vxpose.xlu0.b32.cont [6/16] 0.0, 128
    %250 = vxpose.xlu0.b32.cont [7/16] 0.0, 128
    %251 = vxpose.xlu0.b32.cont [8/16] 0.0, 128
    %252 = vxpose.xlu0.b32.cont [9/16] 0.0, 128
    %253 = vxpose.xlu0.b32.cont [10/16] 0.0, 128
    %254 = vxpose.xlu0.b32.cont [11/16] 0.0, 128
    %255 = vxpose.xlu0.b32.cont [12/16] 0.0, 128
    %256 = vxpose.xlu0.b32.cont [13/16] 0.0, 128
    %257 = vxpose.xlu0.b32.cont [14/16] 0.0, 128
    %258 = vxpose.xlu0.b32.cont [15/16] 0.0, 128
    %259 = vxpose.xlu0.b32.end [16/16] 0.0, 128
    %v260 = vpop.trf.xlu0
    %v261 = vpop.trf.xlu0
    %v262 = vpop.trf.xlu0
    %v263 = vpop.trf.xlu0
    %v264 = vpop.trf.xlu0
    %v265 = vpop.trf.xlu0
    %v266 = vpop.trf.xlu0
    %v267 = vpop.trf.xlu0
    %v268 = vpop.trf.xlu0
    %v269 = vpop.trf.xlu0
    %v270 = vpop.trf.xlu0
    %v271 = vpop.trf.xlu0
    %v272 = vpop.trf.xlu0
    %v273 = vpop.trf.xlu0
    %v274 = vpop.trf.xlu0
    %v275 = vpop.trf.xlu0
    %277 = vset.pattern.permute.xlu0 2
    %278 = vperm.xlu0 %277, %v236
    %v279 = vpop.permute.xlu0 %278
    %282 = vset.pattern.permute.xlu0 2
    %283 = vperm.xlu0 %282, %v241
    %v284 = vpop.permute.xlu0 %283
    %v286 = vlaneseq
    %v287 = vshrl.u32 %v286, 7
    %v288 = vsub.s32 0, %v287
    %v289 = vrot.slane %v260, %v288
    %v290 = vadd.f32 %v279, %v289
    %v291 = vadd.f32 %v284, %v289
    %vm292 = vcmp.gt.f32.partialorder %v290, 0.0
    %vm293 = vcmp.gt.f32.partialorder %v291, 0.0
    %v294 = vmul.f32 %v290, 0.2
    %v295 = vmul.f32 %v291, 0.2
    %v296 = vsel %vm292, %v290, %v294
    %v297 = vsel %vm293, %v291, %v295
    %v298 = vadd.f32 %v296, %v66
    %v299 = vadd.f32 %v297, %v67
    %vm300 = vcmask 130048
    %v301 = vsel %vm300, %v298, -inf
    %302 = vmax.xlane.f32.xlu0 %v301
    %v303 = vpop.xlane.xlu0 %302
    %v304 = vsel %vm300, %v299, -inf
    %305 = vmax.xlane.f32.xlu0 %v304
    %v306 = vpop.xlane.xlu0 %305
    %v307 = vsub.f32 %v298, %v303
    %v308 = vsub.f32 %v299, %v306
    %v309 = vmul.f32 %v307, 1.442695
    %v310 = vpow.pop %v309
    %v311 = vmul.f32 %v308, 1.442695
    %v312 = vpow.pop %v311
    %v313 = vsel %vm300, %v310, 0.0
    %314 = vadd.xlane.f32.xlu0 %v313
    %v315 = vpop.xlane.xlu0 %314
    %v316 = vsel %vm300, %v312, 0.0
    %317 = vadd.xlane.f32.xlu0 %v316
    %v318 = vpop.xlane.xlu0 %317
    %v319 = vrcp.pop %v315
    %v320 = vmul.f32 %v310, %v319
    %v321 = vrcp.pop %v318
    %v322 = vmul.f32 %v312, %v321
    %v324 = vsel %vm300, %v320, 0
    %v327 = vsel %vm300, %v322, 0
    %329 = vmatprep.subr.mxu0 0.0
    %330 = vmatpush1.msra.mxu0 %v145
    %331 = vmatprep.subr.mxu0 0.0
    %332 = vmatpush1.msra.mxu0 %v150
    %333 = vmatprep.subr.mxu0 0.0
    %334 = vmatpush1.msra.mxu0 0.0
    %335 = vmatprep.subr.mxu0 0.0
    %336 = vmatpush1.msra.mxu0 0.0
    %337 = vmatprep.subr.mxu0 0.0
    %338 = vmatpush1.msra.mxu0 0.0
    %339 = vmatprep.subr.mxu0 0.0
    %340 = vmatpush1.msra.mxu0 0.0
    %341 = vmatprep.subr.mxu0 0.0
    %342 = vmatpush1.msra.mxu0 0.0
    %343 = vmatprep.subr.mxu0 0.0
    %344 = vmatpush1.msra.mxu0 0.0
    %345 = vmatprep.subr.mxu0 0.0
    %346 = vmatpush1.msra.mxu0 0.0
    %347 = vmatprep.subr.mxu0 0.0
    %348 = vmatpush1.msra.mxu0 0.0
    %349 = vmatprep.subr.mxu0 0.0
    %350 = vmatpush1.msra.mxu0 0.0
    %351 = vmatprep.subr.mxu0 0.0
    %352 = vmatpush1.msra.mxu0 0.0
    %353 = vmatprep.subr.mxu0 0.0
    %354 = vmatpush1.msra.mxu0 0.0
    %355 = vmatprep.subr.mxu0 0.0
    %356 = vmatpush1.msra.mxu0 0.0
    %357 = vmatprep.subr.mxu0 0.0
    %358 = vmatpush1.msra.mxu0 0.0
    %359 = vmatprep.subr.mxu0 0.0
    %360 = vmatpush1.msra.mxu0 0.0
    %361 = vmatprep.subr.mxu0 0.0
    %362 = vmatpush1.msra.mxu0 0.0
    %363 = vmatprep.subr.mxu0 0.0
    %364 = vmatpush1.msra.mxu0 0.0
    %365 = vmatprep.subr.mxu0 0.0
    %366 = vmatpush1.msra.mxu0 0.0
    %367 = vmatprep.subr.mxu0 0.0
    %368 = vmatpush1.msra.mxu0 0.0
    %369 = vmatprep.subr.mxu0 0.0
    %370 = vmatpush1.msra.mxu0 0.0
    %371 = vmatprep.subr.mxu0 0.0
    %372 = vmatpush1.msra.mxu0 0.0
    %373 = vmatprep.subr.mxu0 0.0
    %374 = vmatpush1.msra.mxu0 0.0
    %375 = vmatprep.subr.mxu0 0.0
    %376 = vmatpush1.msra.mxu0 0.0
    %377 = vmatprep.subr.mxu0 0.0
    %378 = vmatpush1.msra.mxu0 0.0
    %379 = vmatprep.subr.mxu0 0.0
    %380 = vmatpush1.msra.mxu0 0.0
    %381 = vmatprep.subr.mxu0 0.0
    %382 = vmatpush1.msra.mxu0 0.0
    %383 = vmatprep.subr.mxu0 0.0
    %384 = vmatpush1.msra.mxu0 0.0
    %385 = vmatprep.subr.mxu0 0.0
    %386 = vmatpush1.msra.mxu0 0.0
    %387 = vmatprep.subr.mxu0 0.0
    %388 = vmatpush1.msra.mxu0 0.0
    %389 = vmatprep.subr.mxu0 0.0
    %390 = vmatpush1.msra.mxu0 0.0
    %391 = vmatprep.subr.mxu0 0.0
    %392 = vmatpush1.msra.mxu0 0.0
    %393 = vmatprep.mubr.f32.mxu0 0.0
    %394 = vmatmul.mubr.f32.gmra.mrb[0].mxu0 %v324
    %v395 = vpop.f32.mrb[0].mxu0
    %v396 = vadd.f32 0.0, %v395
    %v397 = vpop.f32.mrb[0].mxu0
    %398 = vmatprep.mubr.f32.mxu0 0.0
    %399 = vmatmul.mubr.f32.gmra.mrb[0].mxu0 %v327
    %v400 = vpop.f32.mrb[0].mxu0
    %v401 = vadd.f32 0.0, %v400
    %v402 = vpop.f32.mrb[0].mxu0
    %403 = vdwg.mxu0
    %vm404 = vcmask 261120
    %405 = vst.msk [vmem:[#allocation2] sm:$0xff] %vm404, %v396
    %406 = vst.msk [vmem:[#allocation2 + $0x8] sm:$0xff] %vm404, %v401
    %407 = vrot.lane.b32.xlu0 %v236, 127
    %v408 = vpop.permute.xlu0 %407
    %409 = vrot.lane.b32.xlu0 %v241, 127
    %v410 = vpop.permute.xlu0 %409
    %413 = vxpose.xlu0.b32.start [1/16] %v408, 128
    %414 = vxpose.xlu0.b32.cont [2/16] %v410, 128
    %415 = vxpose.xlu0.b32.cont [3/16] 0.0, 128
    %416 = vxpose.xlu0.b32.cont [4/16] 0.0, 128
    %417 = vxpose.xlu0.b32.cont [5/16] 0.0, 128
    %418 = vxpose.xlu0.b32.cont [6/16] 0.0, 128
    %419 = vxpose.xlu0.b32.cont [7/16] 0.0, 128
    %420 = vxpose.xlu0.b32.cont [8/16] 0.0, 128
    %421 = vxpose.xlu0.b32.cont [9/16] 0.0, 128
    %422 = vxpose.xlu0.b32.cont [10/16] 0.0, 128
    %423 = vxpose.xlu0.b32.cont [11/16] 0.0, 128
    %424 = vxpose.xlu0.b32.cont [12/16] 0.0, 128
    %425 = vxpose.xlu0.b32.cont [13/16] 0.0, 128
    %426 = vxpose.xlu0.b32.cont [14/16] 0.0, 128
    %427 = vxpose.xlu0.b32.cont [15/16] 0.0, 128
    %428 = vxpose.xlu0.b32.end [16/16] 0.0, 128
    %v429 = vpop.trf.xlu0
    %v430 = vpop.trf.xlu0
    %v431 = vpop.trf.xlu0
    %v432 = vpop.trf.xlu0
    %v433 = vpop.trf.xlu0
    %v434 = vpop.trf.xlu0
    %v435 = vpop.trf.xlu0
    %v436 = vpop.trf.xlu0
    %v437 = vpop.trf.xlu0
    %v438 = vpop.trf.xlu0
    %v439 = vpop.trf.xlu0
    %v440 = vpop.trf.xlu0
    %v441 = vpop.trf.xlu0
    %v442 = vpop.trf.xlu0
    %v443 = vpop.trf.xlu0
    %v444 = vpop.trf.xlu0
    %445 = vset.pattern.permute.xlu0 3
    %446 = vperm.xlu0 %445, %v236
    %v447 = vpop.permute.xlu0 %446
    %449 = vset.pattern.permute.xlu0 3
    %450 = vperm.xlu0 %449, %v241
    %v451 = vpop.permute.xlu0 %450
    %v453 = vlaneseq
    %v454 = vshrl.u32 %v453, 7
    %v455 = vsub.s32 0, %v454
    %v456 = vrot.slane %v429, %v455
    %v457 = vadd.f32 %v447, %v456
    %v458 = vadd.f32 %v451, %v456
    %vm459 = vcmp.gt.f32.partialorder %v457, 0.0
    %vm460 = vcmp.gt.f32.partialorder %v458, 0.0
    %v461 = vmul.f32 %v457, 0.2
    %v462 = vmul.f32 %v458, 0.2
    %v463 = vsel %vm459, %v457, %v461
    %v464 = vsel %vm460, %v458, %v462
    %v465 = vadd.f32 %v463, %v66
    %v466 = vadd.f32 %v464, %v67
    %v467 = vsel %vm300, %v465, -inf
    %468 = vmax.xlane.f32.xlu0 %v467
    %v469 = vpop.xlane.xlu0 %468
    %v470 = vsel %vm300, %v466, -inf
    %471 = vmax.xlane.f32.xlu0 %v470
    %v472 = vpop.xlane.xlu0 %471
    %v473 = vsub.f32 %v465, %v469
    %v474 = vsub.f32 %v466, %v472
    %v475 = vmul.f32 %v473, 1.442695
    %v476 = vpow.pop %v475
    %v477 = vmul.f32 %v474, 1.442695
    %v478 = vpow.pop %v477
    %v479 = vsel %vm300, %v476, 0.0
    %480 = vadd.xlane.f32.xlu0 %v479
    %v481 = vpop.xlane.xlu0 %480
    %v482 = vsel %vm300, %v478, 0.0
    %483 = vadd.xlane.f32.xlu0 %v482
    %v484 = vpop.xlane.xlu0 %483
    %v485 = vrcp.pop %v481
    %v486 = vmul.f32 %v476, %v485
    %v487 = vrcp.pop %v484
    %v488 = vmul.f32 %v478, %v487
    %491 = vrot.lane.b32.xlu0 %v145, 96
    %v492 = vpop.permute.xlu0 %491
    %493 = vrot.lane.b32.xlu0 %v150, 96
    %v494 = vpop.permute.xlu0 %493
    %v498 = vsel %vm300, %v486, 0
    %v501 = vsel %vm300, %v488, 0
    %503 = vmatprep.subr.mxu0 0.0
    %504 = vmatpush1.msra.mxu0 %v492
    %505 = vmatprep.subr.mxu0 0.0
    %506 = vmatpush1.msra.mxu0 %v494
    %507 = vmatprep.subr.mxu0 0.0
    %508 = vmatpush1.msra.mxu0 0.0
    %509 = vmatprep.subr.mxu0 0.0
    %510 = vmatpush1.msra.mxu0 0.0
    %511 = vmatprep.subr.mxu0 0.0
    %512 = vmatpush1.msra.mxu0 0.0
    %513 = vmatprep.subr.mxu0 0.0
    %514 = vmatpush1.msra.mxu0 0.0
    %515 = vmatprep.subr.mxu0 0.0
    %516 = vmatpush1.msra.mxu0 0.0
    %517 = vmatprep.subr.mxu0 0.0
    %518 = vmatpush1.msra.mxu0 0.0
    %519 = vmatprep.subr.mxu0 0.0
    %520 = vmatpush1.msra.mxu0 0.0
    %521 = vmatprep.subr.mxu0 0.0
    %522 = vmatpush1.msra.mxu0 0.0
    %523 = vmatprep.subr.mxu0 0.0
    %524 = vmatpush1.msra.mxu0 0.0
    %525 = vmatprep.subr.mxu0 0.0
    %526 = vmatpush1.msra.mxu0 0.0
    %527 = vmatprep.subr.mxu0 0.0
    %528 = vmatpush1.msra.mxu0 0.0
    %529 = vmatprep.subr.mxu0 0.0
    %530 = vmatpush1.msra.mxu0 0.0
    %531 = vmatprep.subr.mxu0 0.0
    %532 = vmatpush1.msra.mxu0 0.0
    %533 = vmatprep.subr.mxu0 0.0
    %534 = vmatpush1.msra.mxu0 0.0
    %535 = vmatprep.subr.mxu0 0.0
    %536 = vmatpush1.msra.mxu0 0.0
    %537 = vmatprep.subr.mxu0 0.0
    %538 = vmatpush1.msra.mxu0 0.0
    %539 = vmatprep.subr.mxu0 0.0
    %540 = vmatpush1.msra.mxu0 0.0
    %541 = vmatprep.subr.mxu0 0.0
    %542 = vmatpush1.msra.mxu0 0.0
    %543 = vmatprep.subr.mxu0 0.0
    %544 = vmatpush1.msra.mxu0 0.0
    %545 = vmatprep.subr.mxu0 0.0
    %546 = vmatpush1.msra.mxu0 0.0
    %547 = vmatprep.subr.mxu0 0.0
    %548 = vmatpush1.msra.mxu0 0.0
    %549 = vmatprep.subr.mxu0 0.0
    %550 = vmatpush1.msra.mxu0 0.0
    %551 = vmatprep.subr.mxu0 0.0
    %552 = vmatpush1.msra.mxu0 0.0
    %553 = vmatprep.subr.mxu0 0.0
    %554 = vmatpush1.msra.mxu0 0.0
    %555 = vmatprep.subr.mxu0 0.0
    %556 = vmatpush1.msra.mxu0 0.0
    %557 = vmatprep.subr.mxu0 0.0
    %558 = vmatpush1.msra.mxu0 0.0
    %559 = vmatprep.subr.mxu0 0.0
    %560 = vmatpush1.msra.mxu0 0.0
    %561 = vmatprep.subr.mxu0 0.0
    %562 = vmatpush1.msra.mxu0 0.0
    %563 = vmatprep.subr.mxu0 0.0
    %564 = vmatpush1.msra.mxu0 0.0
    %565 = vmatprep.subr.mxu0 0.0
    %566 = vmatpush1.msra.mxu0 0.0
    %567 = vmatprep.mubr.f32.mxu0 0.0
    %568 = vmatmul.mubr.f32.gmra.mrb[0].mxu0 %v498
    %v569 = vpop.f32.mrb[0].mxu0
    %v570 = vadd.f32 0.0, %v569
    %v571 = vpop.f32.mrb[0].mxu0
    %572 = vmatprep.mubr.f32.mxu0 0.0
    %573 = vmatmul.mubr.f32.gmra.mrb[0].mxu0 %v501
    %v574 = vpop.f32.mrb[0].mxu0
    %v575 = vadd.f32 0.0, %v574
    %v576 = vpop.f32.mrb[0].mxu0
    %577 = vdwg.mxu0
    %580 = vrot.lane.b32.xlu0 %v570, 32
    %v581 = vpop.permute.xlu0 %580
    %582 = vrot.lane.b32.xlu0 %v575, 32
    %v583 = vpop.permute.xlu0 %582
    %vm586 = vcmask 523520
    %587 = vst.msk [vmem:[#allocation2] sm:$0xff] %vm586, %v581
    %588 = vst.msk [vmem:[#allocation2 + $0x8] sm:$0xff] %vm586, %v583
    %v589 = vld [vmem:[#allocation2] sm:$0xff]
    %v590 = vld [vmem:[#allocation2 + $0x8] sm:$0xff]
    %v591 = vld [vmem:[%s6] sm:$0x1]
    %v593 = vlaneseq
    %v594 = vshrl.u32 %v593, 7
    %v595 = vsub.s32 0, %v594
    %v596 = vrot.slane %v591, %v595
    %v598 = vadd.f32 %v589, %v596
    %v599 = vadd.f32 %v590, %v596
    %vm600 = vcmp.gt.f32.partialorder %v598, 0.0
    %vm601 = vcmp.gt.f32.partialorder %v599, 0.0
    %v602 = vmin.f32 %v598, 0.0
    %v603 = vmin.f32 %v599, 0.0
    %v604 = vmul.f32 %v602, 1.442695
    %v605 = vpow.pop %v604
    %v606 = vmul.f32 %v603, 1.442695
    %v607 = vpow.pop %v606
    %v608 = vsub.f32 %v605, 1.0
    %v609 = vsub.f32 %v607, 1.0
    %v610 = vsel %vm600, %v598, %v608
    %v611 = vsel %vm601, %v599, %v609
    %612 = vst [vmem:[#allocation2] sm:$0xff] %v610
    %613 = vst [vmem:[#allocation2 + $0x8] sm:$0xff] %v611
    %v614 = vld [vmem:[#allocation2] sm:$0xff]
    %v615 = vld [vmem:[#allocation2 + $0x8] sm:$0xff]
    %v616 = vld [vmem:[%s7] sm:$0xff]
    %v617 = vld [vmem:[%s7 + $0x8] sm:$0xff]
    %v618 = vld [vmem:[%s7 + $0x10] sm:$0xff]
    %v619 = vld [vmem:[%s7 + $0x18] sm:$0xff]
    %v620 = vld [vmem:[%s7 + $0x20] sm:$0xff]
    %v621 = vld [vmem:[%s7 + $0x28] sm:$0xff]
    %v622 = vld [vmem:[%s7 + $0x30] sm:$0xff]
    %v623 = vld [vmem:[%s7 + $0x38] sm:$0xff]
    %v624 = vld [vmem:[%s7 + $0x40] sm:$0xff]
    %v625 = vld [vmem:[%s7 + $0x48] sm:$0xff]
    %v626 = vld [vmem:[%s7 + $0x50] sm:$0xff]
    %v627 = vld [vmem:[%s7 + $0x58] sm:$0xff]
    %v628 = vld [vmem:[%s7 + $0x60] sm:$0xff]
    %v629 = vld [vmem:[%s7 + $0x68] sm:$0xff]
    %v630 = vld [vmem:[%s7 + $0x70] sm:$0xff]
    %v631 = vld [vmem:[%s7 + $0x78] sm:$0xff]
    %632 = vmatprep.subr.mxu0 0.0
    %633 = vmatpush1.msra.mxu0 %v616
    %634 = vmatprep.subr.mxu0 0.0
    %635 = vmatpush1.msra.mxu0 %v617
    %636 = vmatprep.subr.mxu0 0.0
    %637 = vmatpush1.msra.mxu0 %v618
    %638 = vmatprep.subr.mxu0 0.0
    %639 = vmatpush1.msra.mxu0 %v619
    %640 = vmatprep.subr.mxu0 0.0
    %641 = vmatpush1.msra.mxu0 %v620
    %642 = vmatprep.subr.mxu0 0.0
    %643 = vmatpush1.msra.mxu0 %v621
    %644 = vmatprep.subr.mxu0 0.0
    %645 = vmatpush1.msra.mxu0 %v622
    %646 = vmatprep.subr.mxu0 0.0
    %647 = vmatpush1.msra.mxu0 %v623
    %648 = vmatprep.subr.mxu0 0.0
    %649 = vmatpush1.msra.mxu0 %v624
    %650 = vmatprep.subr.mxu0 0.0
    %651 = vmatpush1.msra.mxu0 %v625
    %652 = vmatprep.subr.mxu0 0.0
    %653 = vmatpush1.msra.mxu0 %v626
    %654 = vmatprep.subr.mxu0 0.0
    %655 = vmatpush1.msra.mxu0 %v627
    %656 = vmatprep.subr.mxu0 0.0
    %657 = vmatpush1.msra.mxu0 %v628
    %658 = vmatprep.subr.mxu0 0.0
    %659 = vmatpush1.msra.mxu0 %v629
    %660 = vmatprep.subr.mxu0 0.0
    %661 = vmatpush1.msra.mxu0 %v630
    %662 = vmatprep.subr.mxu0 0.0
    %663 = vmatpush1.msra.mxu0 %v631
    %664 = vmatprep.subr.mxu0 0.0
    %665 = vmatpush1.msra.mxu0 0.0
    %666 = vmatprep.subr.mxu0 0.0
    %667 = vmatpush1.msra.mxu0 0.0
    %668 = vmatprep.subr.mxu0 0.0
    %669 = vmatpush1.msra.mxu0 0.0
    %670 = vmatprep.subr.mxu0 0.0
    %671 = vmatpush1.msra.mxu0 0.0
    %672 = vmatprep.subr.mxu0 0.0
    %673 = vmatpush1.msra.mxu0 0.0
    %674 = vmatprep.subr.mxu0 0.0
    %675 = vmatpush1.msra.mxu0 0.0
    %676 = vmatprep.subr.mxu0 0.0
    %677 = vmatpush1.msra.mxu0 0.0
    %678 = vmatprep.subr.mxu0 0.0
    %679 = vmatpush1.msra.mxu0 0.0
    %680 = vmatprep.subr.mxu0 0.0
    %681 = vmatpush1.msra.mxu0 0.0
    %682 = vmatprep.subr.mxu0 0.0
    %683 = vmatpush1.msra.mxu0 0.0
    %684 = vmatprep.subr.mxu0 0.0
    %685 = vmatpush1.msra.mxu0 0.0
    %686 = vmatprep.subr.mxu0 0.0
    %687 = vmatpush1.msra.mxu0 0.0
    %688 = vmatprep.subr.mxu0 0.0
    %689 = vmatpush1.msra.mxu0 0.0
    %690 = vmatprep.subr.mxu0 0.0
    %691 = vmatpush1.msra.mxu0 0.0
    %692 = vmatprep.subr.mxu0 0.0
    %693 = vmatpush1.msra.mxu0 0.0
    %694 = vmatprep.subr.mxu0 0.0
    %695 = vmatpush1.msra.mxu0 0.0
    %696 = vmatprep.mubr.f32.mxu0 0.0
    %697 = vmatmul.mubr.f32.gmra.mrb[0].mxu0 %v614
    %v698 = vpop.f32.mrb[0].mxu0
    %v699 = vadd.f32 0.0, %v698
    %v700 = vpop.f32.mrb[0].mxu0
    %701 = vmatprep.mubr.f32.mxu0 0.0
    %702 = vmatmul.mubr.f32.gmra.mrb[0].mxu0 %v615
    %v703 = vpop.f32.mrb[0].mxu0
    %v704 = vadd.f32 0.0, %v703
    %v705 = vpop.f32.mrb[0].mxu0
    %706 = vdwg.mxu0
    %v707 = vld [vmem:[%s8] sm:$0xff]
    %v708 = vld [vmem:[%s8 + $0x8] sm:$0xff]
    %v709 = vld [vmem:[%s8 + $0x10] sm:$0xff]
    %v710 = vld [vmem:[%s8 + $0x18] sm:$0xff]
    %v711 = vld [vmem:[%s8 + $0x20] sm:$0xff]
    %v712 = vld [vmem:[%s8 + $0x28] sm:$0xff]
    %v713 = vld [vmem:[%s8 + $0x30] sm:$0xff]
    %v714 = vld [vmem:[%s8 + $0x38] sm:$0xff]
    %v715 = vld [vmem:[%s8 + $0x40] sm:$0xff]
    %v716 = vld [vmem:[%s8 + $0x48] sm:$0xff]
    %v717 = vld [vmem:[%s8 + $0x50] sm:$0xff]
    %v718 = vld [vmem:[%s8 + $0x58] sm:$0xff]
    %v719 = vld [vmem:[%s8 + $0x60] sm:$0xff]
    %v720 = vld [vmem:[%s8 + $0x68] sm:$0xff]
    %v721 = vld [vmem:[%s8 + $0x70] sm:$0xff]
    %v722 = vld [vmem:[%s8 + $0x78] sm:$0xff]
    %723 = vmatprep.subr.mxu0 0.0
    %724 = vmatpush1.msra.mxu0 %v707
    %725 = vmatprep.subr.mxu0 0.0
    %726 = vmatpush1.msra.mxu0 %v708
    %727 = vmatprep.subr.mxu0 0.0
    %728 = vmatpush1.msra.mxu0 %v709
    %729 = vmatprep.subr.mxu0 0.0
    %730 = vmatpush1.msra.mxu0 %v710
    %731 = vmatprep.subr.mxu0 0.0
    %732 = vmatpush1.msra.mxu0 %v711
    %733 = vmatprep.subr.mxu0 0.0
    %734 = vmatpush1.msra.mxu0 %v712
    %735 = vmatprep.subr.mxu0 0.0
    %736 = vmatpush1.msra.mxu0 %v713
    %737 = vmatprep.subr.mxu0 0.0
    %738 = vmatpush1.msra.mxu0 %v714
    %739 = vmatprep.subr.mxu0 0.0
    %740 = vmatpush1.msra.mxu0 %v715
    %741 = vmatprep.subr.mxu0 0.0
    %742 = vmatpush1.msra.mxu0 %v716
    %743 = vmatprep.subr.mxu0 0.0
    %744 = vmatpush1.msra.mxu0 %v717
    %745 = vmatprep.subr.mxu0 0.0
    %746 = vmatpush1.msra.mxu0 %v718
    %747 = vmatprep.subr.mxu0 0.0
    %748 = vmatpush1.msra.mxu0 %v719
    %749 = vmatprep.subr.mxu0 0.0
    %750 = vmatpush1.msra.mxu0 %v720
    %751 = vmatprep.subr.mxu0 0.0
    %752 = vmatpush1.msra.mxu0 %v721
    %753 = vmatprep.subr.mxu0 0.0
    %754 = vmatpush1.msra.mxu0 %v722
    %755 = vmatprep.subr.mxu0 0.0
    %756 = vmatpush1.msra.mxu0 0.0
    %757 = vmatprep.subr.mxu0 0.0
    %758 = vmatpush1.msra.mxu0 0.0
    %759 = vmatprep.subr.mxu0 0.0
    %760 = vmatpush1.msra.mxu0 0.0
    %761 = vmatprep.subr.mxu0 0.0
    %762 = vmatpush1.msra.mxu0 0.0
    %763 = vmatprep.subr.mxu0 0.0
    %764 = vmatpush1.msra.mxu0 0.0
    %765 = vmatprep.subr.mxu0 0.0
    %766 = vmatpush1.msra.mxu0 0.0
    %767 = vmatprep.subr.mxu0 0.0
    %768 = vmatpush1.msra.mxu0 0.0
    %769 = vmatprep.subr.mxu0 0.0
    %770 = vmatpush1.msra.mxu0 0.0
    %771 = vmatprep.subr.mxu0 0.0
    %772 = vmatpush1.msra.mxu0 0.0
    %773 = vmatprep.subr.mxu0 0.0
    %774 = vmatpush1.msra.mxu0 0.0
    %775 = vmatprep.subr.mxu0 0.0
    %776 = vmatpush1.msra.mxu0 0.0
    %777 = vmatprep.subr.mxu0 0.0
    %778 = vmatpush1.msra.mxu0 0.0
    %779 = vmatprep.subr.mxu0 0.0
    %780 = vmatpush1.msra.mxu0 0.0
    %781 = vmatprep.subr.mxu0 0.0
    %782 = vmatpush1.msra.mxu0 0.0
    %783 = vmatprep.subr.mxu0 0.0
    %784 = vmatpush1.msra.mxu0 0.0
    %785 = vmatprep.subr.mxu0 0.0
    %786 = vmatpush1.msra.mxu0 0.0
    %787 = vmatprep.mubr.f32.mxu0 0.0
    %788 = vmatmul.mubr.f32.gmra.mrb[0].mxu0 %v699
    %v789 = vpop.f32.mrb[0].mxu0
    %v790 = vadd.f32 0.0, %v789
    %v791 = vpop.f32.mrb[0].mxu0
    %792 = vmatprep.mubr.f32.mxu0 0.0
    %793 = vmatmul.mubr.f32.gmra.mrb[0].mxu0 %v704
    %v794 = vpop.f32.mrb[0].mxu0
    %v795 = vadd.f32 0.0, %v794
    %v796 = vpop.f32.mrb[0].mxu0
    %797 = vdwg.mxu0
    %798 = vxpose.xlu0.b32.start [1/16] %v790, 128
    %799 = vxpose.xlu0.b32.cont [2/16] %v795, 128
    %800 = vxpose.xlu0.b32.cont [3/16] 0.0, 128
    %801 = vxpose.xlu0.b32.cont [4/16] 0.0, 128
    %802 = vxpose.xlu0.b32.cont [5/16] 0.0, 128
    %803 = vxpose.xlu0.b32.cont [6/16] 0.0, 128
    %804 = vxpose.xlu0.b32.cont [7/16] 0.0, 128
    %805 = vxpose.xlu0.b32.cont [8/16] 0.0, 128
    %806 = vxpose.xlu0.b32.cont [9/16] 0.0, 128
    %807 = vxpose.xlu0.b32.cont [10/16] 0.0, 128
    %808 = vxpose.xlu0.b32.cont [11/16] 0.0, 128
    %809 = vxpose.xlu0.b32.cont [12/16] 0.0, 128
    %810 = vxpose.xlu0.b32.cont [13/16] 0.0, 128
    %811 = vxpose.xlu0.b32.cont [14/16] 0.0, 128
    %812 = vxpose.xlu0.b32.cont [15/16] 0.0, 128
    %813 = vxpose.xlu0.b32.end [16/16] 0.0, 128
    %v814 = vpop.trf.xlu0
    %v815 = vpop.trf.xlu0
    %v816 = vpop.trf.xlu0
    %v817 = vpop.trf.xlu0
    %v818 = vpop.trf.xlu0
    %v819 = vpop.trf.xlu0
    %v820 = vpop.trf.xlu0
    %v821 = vpop.trf.xlu0
    %v822 = vpop.trf.xlu0
    %v823 = vpop.trf.xlu0
    %v824 = vpop.trf.xlu0
    %v825 = vpop.trf.xlu0
    %v826 = vpop.trf.xlu0
    %v827 = vpop.trf.xlu0
    %v828 = vpop.trf.xlu0
    %v829 = vpop.trf.xlu0
    %831 = vset.pattern.permute.xlu0 2
    %832 = vperm.xlu0 %831, %v790
    %v833 = vpop.permute.xlu0 %832
    %836 = vset.pattern.permute.xlu0 2
    %837 = vperm.xlu0 %836, %v795
    %v838 = vpop.permute.xlu0 %837
    %v840 = vlaneseq
    %v841 = vshrl.u32 %v840, 7
    %v842 = vsub.s32 0, %v841
    %v843 = vrot.slane %v814, %v842
    %v844 = vadd.f32 %v833, %v843
    %v845 = vadd.f32 %v838, %v843
    %vm846 = vcmp.gt.f32.partialorder %v844, 0.0
    %vm847 = vcmp.gt.f32.partialorder %v845, 0.0
    %v848 = vmul.f32 %v844, 0.2
    %v849 = vmul.f32 %v845, 0.2
    %v850 = vsel %vm846, %v844, %v848
    %v851 = vsel %vm847, %v845, %v849
    %v852 = vadd.f32 %v850, %v66
    %v853 = vadd.f32 %v851, %v67
    %v854 = vsel %vm300, %v852, -inf
    %855 = vmax.xlane.f32.xlu0 %v854
    %v856 = vpop.xlane.xlu0 %855
    %v857 = vsel %vm300, %v853, -inf
    %858 = vmax.xlane.f32.xlu0 %v857
    %v859 = vpop.xlane.xlu0 %858
    %v860 = vsub.f32 %v852, %v856
    %v861 = vsub.f32 %v853, %v859
    %v862 = vmul.f32 %v860, 1.442695
    %v863 = vpow.pop %v862
    %v864 = vmul.f32 %v861, 1.442695
    %v865 = vpow.pop %v864
    %v866 = vsel %vm300, %v863, 0.0
    %867 = vadd.xlane.f32.xlu0 %v866
    %v868 = vpop.xlane.xlu0 %867
    %v869 = vsel %vm300, %v865, 0.0
    %870 = vadd.xlane.f32.xlu0 %v869
    %v871 = vpop.xlane.xlu0 %870
    %v872 = vrcp.pop %v868
    %v873 = vmul.f32 %v863, %v872
    %v874 = vrcp.pop %v871
    %v875 = vmul.f32 %v865, %v874
    %v877 = vsel %vm300, %v873, 0
    %v880 = vsel %vm300, %v875, 0
    %882 = vmatprep.subr.mxu0 0.0
    %883 = vmatpush1.msra.mxu0 %v699
    %884 = vmatprep.subr.mxu0 0.0
    %885 = vmatpush1.msra.mxu0 %v704
    %886 = vmatprep.subr.mxu0 0.0
    %887 = vmatpush1.msra.mxu0 0.0
    %888 = vmatprep.subr.mxu0 0.0
    %889 = vmatpush1.msra.mxu0 0.0
    %890 = vmatprep.subr.mxu0 0.0
    %891 = vmatpush1.msra.mxu0 0.0
    %892 = vmatprep.subr.mxu0 0.0
    %893 = vmatpush1.msra.mxu0 0.0
    %894 = vmatprep.subr.mxu0 0.0
    %895 = vmatpush1.msra.mxu0 0.0
    %896 = vmatprep.subr.mxu0 0.0
    %897 = vmatpush1.msra.mxu0 0.0
    %898 = vmatprep.subr.mxu0 0.0
    %899 = vmatpush1.msra.mxu0 0.0
    %900 = vmatprep.subr.mxu0 0.0
    %901 = vmatpush1.msra.mxu0 0.0
    %902 = vmatprep.subr.mxu0 0.0
    %903 = vmatpush1.msra.mxu0 0.0
    %904 = vmatprep.subr.mxu0 0.0
    %905 = vmatpush1.msra.mxu0 0.0
    %906 = vmatprep.subr.mxu0 0.0
    %907 = vmatpush1.msra.mxu0 0.0
    %908 = vmatprep.subr.mxu0 0.0
    %909 = vmatpush1.msra.mxu0 0.0
    %910 = vmatprep.subr.mxu0 0.0
    %911 = vmatpush1.msra.mxu0 0.0
    %912 = vmatprep.subr.mxu0 0.0
    %913 = vmatpush1.msra.mxu0 0.0
    %914 = vmatprep.subr.mxu0 0.0
    %915 = vmatpush1.msra.mxu0 0.0
    %916 = vmatprep.subr.mxu0 0.0
    %917 = vmatpush1.msra.mxu0 0.0
    %918 = vmatprep.subr.mxu0 0.0
    %919 = vmatpush1.msra.mxu0 0.0
    %920 = vmatprep.subr.mxu0 0.0
    %921 = vmatpush1.msra.mxu0 0.0
    %922 = vmatprep.subr.mxu0 0.0
    %923 = vmatpush1.msra.mxu0 0.0
    %924 = vmatprep.subr.mxu0 0.0
    %925 = vmatpush1.msra.mxu0 0.0
    %926 = vmatprep.subr.mxu0 0.0
    %927 = vmatpush1.msra.mxu0 0.0
    %928 = vmatprep.subr.mxu0 0.0
    %929 = vmatpush1.msra.mxu0 0.0
    %930 = vmatprep.subr.mxu0 0.0
    %931 = vmatpush1.msra.mxu0 0.0
    %932 = vmatprep.subr.mxu0 0.0
    %933 = vmatpush1.msra.mxu0 0.0
    %934 = vmatprep.subr.mxu0 0.0
    %935 = vmatpush1.msra.mxu0 0.0
    %936 = vmatprep.subr.mxu0 0.0
    %937 = vmatpush1.msra.mxu0 0.0
    %938 = vmatprep.subr.mxu0 0.0
    %939 = vmatpush1.msra.mxu0 0.0
    %940 = vmatprep.subr.mxu0 0.0
    %941 = vmatpush1.msra.mxu0 0.0
    %942 = vmatprep.subr.mxu0 0.0
    %943 = vmatpush1.msra.mxu0 0.0
    %944 = vmatprep.subr.mxu0 0.0
    %945 = vmatpush1.msra.mxu0 0.0
    %946 = vmatprep.mubr.f32.mxu0 0.0
    %947 = vmatmul.mubr.f32.gmra.mrb[0].mxu0 %v877
    %v948 = vpop.f32.mrb[0].mxu0
    %v949 = vadd.f32 0.0, %v948
    %v950 = vpop.f32.mrb[0].mxu0
    %951 = vmatprep.mubr.f32.mxu0 0.0
    %952 = vmatmul.mubr.f32.gmra.mrb[0].mxu0 %v880
    %v953 = vpop.f32.mrb[0].mxu0
    %v954 = vadd.f32 0.0, %v953
    %v955 = vpop.f32.mrb[0].mxu0
    %956 = vdwg.mxu0
    %957 = vst.msk [vmem:[#allocation3] sm:$0xff] %vm404, %v949
    %958 = vst.msk [vmem:[#allocation3 + $0x8] sm:$0xff] %vm404, %v954
    %959 = vrot.lane.b32.xlu0 %v790, 127
    %v960 = vpop.permute.xlu0 %959
    %961 = vrot.lane.b32.xlu0 %v795, 127
    %v962 = vpop.permute.xlu0 %961
    %965 = vxpose.xlu0.b32.start [1/16] %v960, 128
    %966 = vxpose.xlu0.b32.cont [2/16] %v962, 128
    %967 = vxpose.xlu0.b32.cont [3/16] 0.0, 128
    %968 = vxpose.xlu0.b32.cont [4/16] 0.0, 128
    %969 = vxpose.xlu0.b32.cont [5/16] 0.0, 128
    %970 = vxpose.xlu0.b32.cont [6/16] 0.0, 128
    %971 = vxpose.xlu0.b32.cont [7/16] 0.0, 128
    %972 = vxpose.xlu0.b32.cont [8/16] 0.0, 128
    %973 = vxpose.xlu0.b32.cont [9/16] 0.0, 128
    %974 = vxpose.xlu0.b32.cont [10/16] 0.0, 128
    %975 = vxpose.xlu0.b32.cont [11/16] 0.0, 128
    %976 = vxpose.xlu0.b32.cont [12/16] 0.0, 128
    %977 = vxpose.xlu0.b32.cont [13/16] 0.0, 128
    %978 = vxpose.xlu0.b32.cont [14/16] 0.0, 128
    %979 = vxpose.xlu0.b32.cont [15/16] 0.0, 128
    %980 = vxpose.xlu0.b32.end [16/16] 0.0, 128
    %v981 = vpop.trf.xlu0
    %v982 = vpop.trf.xlu0
    %v983 = vpop.trf.xlu0
    %v984 = vpop.trf.xlu0
    %v985 = vpop.trf.xlu0
    %v986 = vpop.trf.xlu0
    %v987 = vpop.trf.xlu0
    %v988 = vpop.trf.xlu0
    %v989 = vpop.trf.xlu0
    %v990 = vpop.trf.xlu0
    %v991 = vpop.trf.xlu0
    %v992 = vpop.trf.xlu0
    %v993 = vpop.trf.xlu0
    %v994 = vpop.trf.xlu0
    %v995 = vpop.trf.xlu0
    %v996 = vpop.trf.xlu0
    %997 = vset.pattern.permute.xlu0 3
    %998 = vperm.xlu0 %997, %v790
    %v999 = vpop.permute.xlu0 %998
    %1001 = vset.pattern.permute.xlu0 3
    %1002 = vperm.xlu0 %1001, %v795
    %v1003 = vpop.permute.xlu0 %1002
    %v1005 = vlaneseq
    %v1006 = vshrl.u32 %v1005, 7
    %v1007 = vsub.s32 0, %v1006
    %v1008 = vrot.slane %v981, %v1007
    %v1009 = vadd.f32 %v999, %v1008
    %v1010 = vadd.f32 %v1003, %v1008
    %vm1011 = vcmp.gt.f32.partialorder %v1009, 0.0
    %vm1012 = vcmp.gt.f32.partialorder %v1010, 0.0
    %v1013 = vmul.f32 %v1009, 0.2
    %v1014 = vmul.f32 %v1010, 0.2
    %v1015 = vsel %vm1011, %v1009, %v1013
    %v1016 = vsel %vm1012, %v1010, %v1014
    %v1017 = vadd.f32 %v1015, %v66
    %v1018 = vadd.f32 %v1016, %v67
    %v1019 = vsel %vm300, %v1017, -inf
    %1020 = vmax.xlane.f32.xlu0 %v1019
    %v1021 = vpop.xlane.xlu0 %1020
    %v1022 = vsel %vm300, %v1018, -inf
    %1023 = vmax.xlane.f32.xlu0 %v1022
    %v1024 = vpop.xlane.xlu0 %1023
    %v1025 = vsub.f32 %v1017, %v1021
    %v1026 = vsub.f32 %v1018, %v1024
    %v1027 = vmul.f32 %v1025, 1.442695
    %v1028 = vpow.pop %v1027
    %v1029 = vmul.f32 %v1026, 1.442695
    %v1030 = vpow.pop %v1029
    %v1031 = vsel %vm300, %v1028, 0.0
    %1032 = vadd.xlane.f32.xlu0 %v1031
    %v1033 = vpop.xlane.xlu0 %1032
    %v1034 = vsel %vm300, %v1030, 0.0
    %1035 = vadd.xlane.f32.xlu0 %v1034
    %v1036 = vpop.xlane.xlu0 %1035
    %v1037 = vrcp.pop %v1033
    %v1038 = vmul.f32 %v1028, %v1037
    %v1039 = vrcp.pop %v1036
    %v1040 = vmul.f32 %v1030, %v1039
    %1043 = vrot.lane.b32.xlu0 %v699, 96
    %v1044 = vpop.permute.xlu0 %1043
    %1045 = vrot.lane.b32.xlu0 %v704, 96
    %v1046 = vpop.permute.xlu0 %1045
    %v1050 = vsel %vm300, %v1038, 0
    %v1053 = vsel %vm300, %v1040, 0
    %1055 = vmatprep.subr.mxu0 0.0
    %1056 = vmatpush1.msra.mxu0 %v1044
    %1057 = vmatprep.subr.mxu0 0.0
    %1058 = vmatpush1.msra.mxu0 %v1046
    %1059 = vmatprep.subr.mxu0 0.0
    %1060 = vmatpush1.msra.mxu0 0.0
    %1061 = vmatprep.subr.mxu0 0.0
    %1062 = vmatpush1.msra.mxu0 0.0
    %1063 = vmatprep.subr.mxu0 0.0
    %1064 = vmatpush1.msra.mxu0 0.0
    %1065 = vmatprep.subr.mxu0 0.0
    %1066 = vmatpush1.msra.mxu0 0.0
    %1067 = vmatprep.subr.mxu0 0.0
    %1068 = vmatpush1.msra.mxu0 0.0
    %1069 = vmatprep.subr.mxu0 0.0
    %1070 = vmatpush1.msra.mxu0 0.0
    %1071 = vmatprep.subr.mxu0 0.0
    %1072 = vmatpush1.msra.mxu0 0.0
    %1073 = vmatprep.subr.mxu0 0.0
    %1074 = vmatpush1.msra.mxu0 0.0
    %1075 = vmatprep.subr.mxu0 0.0
    %1076 = vmatpush1.msra.mxu0 0.0
    %1077 = vmatprep.subr.mxu0 0.0
    %1078 = vmatpush1.msra.mxu0 0.0
    %1079 = vmatprep.subr.mxu0 0.0
    %1080 = vmatpush1.msra.mxu0 0.0
    %1081 = vmatprep.subr.mxu0 0.0
    %1082 = vmatpush1.msra.mxu0 0.0
    %1083 = vmatprep.subr.mxu0 0.0
    %1084 = vmatpush1.msra.mxu0 0.0
    %1085 = vmatprep.subr.mxu0 0.0
    %1086 = vmatpush1.msra.mxu0 0.0
    %1087 = vmatprep.subr.mxu0 0.0
    %1088 = vmatpush1.msra.mxu0 0.0
    %1089 = vmatprep.subr.mxu0 0.0
    %1090 = vmatpush1.msra.mxu0 0.0
    %1091 = vmatprep.subr.mxu0 0.0
    %1092 = vmatpush1.msra.mxu0 0.0
    %1093 = vmatprep.subr.mxu0 0.0
    %1094 = vmatpush1.msra.mxu0 0.0
    %1095 = vmatprep.subr.mxu0 0.0
    %1096 = vmatpush1.msra.mxu0 0.0
    %1097 = vmatprep.subr.mxu0 0.0
    %1098 = vmatpush1.msra.mxu0 0.0
    %1099 = vmatprep.subr.mxu0 0.0
    %1100 = vmatpush1.msra.mxu0 0.0
    %1101 = vmatprep.subr.mxu0 0.0
    %1102 = vmatpush1.msra.mxu0 0.0
    %1103 = vmatprep.subr.mxu0 0.0
    %1104 = vmatpush1.msra.mxu0 0.0
    %1105 = vmatprep.subr.mxu0 0.0
    %1106 = vmatpush1.msra.mxu0 0.0
    %1107 = vmatprep.subr.mxu0 0.0
    %1108 = vmatpush1.msra.mxu0 0.0
    %1109 = vmatprep.subr.mxu0 0.0
    %1110 = vmatpush1.msra.mxu0 0.0
    %1111 = vmatprep.subr.mxu0 0.0
    %1112 = vmatpush1.msra.mxu0 0.0
    %1113 = vmatprep.subr.mxu0 0.0
    %1114 = vmatpush1.msra.mxu0 0.0
    %1115 = vmatprep.subr.mxu0 0.0
    %1116 = vmatpush1.msra.mxu0 0.0
    %1117 = vmatprep.subr.mxu0 0.0
    %1118 = vmatpush1.msra.mxu0 0.0
    %1119 = vmatprep.mubr.f32.mxu0 0.0
    %1120 = vmatmul.mubr.f32.gmra.mrb[0].mxu0 %v1050
    %v1121 = vpop.f32.mrb[0].mxu0
    %v1122 = vadd.f32 0.0, %v1121
    %v1123 = vpop.f32.mrb[0].mxu0
    %1124 = vmatprep.mubr.f32.mxu0 0.0
    %1125 = vmatmul.mubr.f32.gmra.mrb[0].mxu0 %v1053
    %v1126 = vpop.f32.mrb[0].mxu0
    %v1127 = vadd.f32 0.0, %v1126
    %v1128 = vpop.f32.mrb[0].mxu0
    %1129 = vdwg.mxu0
    %1132 = vrot.lane.b32.xlu0 %v1122, 32
    %v1133 = vpop.permute.xlu0 %1132
    %1134 = vrot.lane.b32.xlu0 %v1127, 32
    %v1135 = vpop.permute.xlu0 %1134
    %1138 = vst.msk [vmem:[#allocation3] sm:$0xff] %vm586, %v1133
    %1139 = vst.msk [vmem:[#allocation3 + $0x8] sm:$0xff] %vm586, %v1135
    %v1140 = vld [vmem:[#allocation3] sm:$0xff]
    %v1141 = vld [vmem:[#allocation3 + $0x8] sm:$0xff]
    %v1142 = vld [vmem:[%s9] sm:$0x1]
    %v1144 = vlaneseq
    %v1145 = vshrl.u32 %v1144, 7
    %v1146 = vsub.s32 0, %v1145
    %v1147 = vrot.slane %v1142, %v1146
    %v1149 = vadd.f32 %v1140, %v1147
    %v1150 = vadd.f32 %v1141, %v1147
    %vm1151 = vcmp.gt.f32.partialorder %v1149, 0.0
    %vm1152 = vcmp.gt.f32.partialorder %v1150, 0.0
    %v1153 = vmin.f32 %v1149, 0.0
    %v1154 = vmin.f32 %v1150, 0.0
    %v1155 = vmul.f32 %v1153, 1.442695
    %v1156 = vpow.pop %v1155
    %v1157 = vmul.f32 %v1154, 1.442695
    %v1158 = vpow.pop %v1157
    %v1159 = vsub.f32 %v1156, 1.0
    %v1160 = vsub.f32 %v1158, 1.0
    %v1161 = vsel %vm1151, %v1149, %v1159
    %v1162 = vsel %vm1152, %v1150, %v1160
    %1163 = vst [vmem:[#allocation3] sm:$0xff] %v1161
    %1164 = vst [vmem:[#allocation3 + $0x8] sm:$0xff] %v1162
    %v1165 = vld [vmem:[#allocation3] sm:$0xff]
    %v1166 = vld [vmem:[#allocation3 + $0x8] sm:$0xff]
    %v1167 = vld [vmem:[%s10] sm:$0xff]
    %v1168 = vld [vmem:[%s10 + $0x8] sm:$0xff]
    %v1169 = vld [vmem:[%s10 + $0x10] sm:$0xff]
    %v1170 = vld [vmem:[%s10 + $0x18] sm:$0xff]
    %v1171 = vld [vmem:[%s10 + $0x20] sm:$0xff]
    %v1172 = vld [vmem:[%s10 + $0x28] sm:$0xff]
    %v1173 = vld [vmem:[%s10 + $0x30] sm:$0xff]
    %v1174 = vld [vmem:[%s10 + $0x38] sm:$0xff]
    %v1175 = vld [vmem:[%s10 + $0x40] sm:$0xff]
    %v1176 = vld [vmem:[%s10 + $0x48] sm:$0xff]
    %v1177 = vld [vmem:[%s10 + $0x50] sm:$0xff]
    %v1178 = vld [vmem:[%s10 + $0x58] sm:$0xff]
    %v1179 = vld [vmem:[%s10 + $0x60] sm:$0xff]
    %v1180 = vld [vmem:[%s10 + $0x68] sm:$0xff]
    %v1181 = vld [vmem:[%s10 + $0x70] sm:$0xff]
    %v1182 = vld [vmem:[%s10 + $0x78] sm:$0xff]
    %1183 = vmatprep.subr.mxu0 0.0
    %1184 = vmatpush1.msra.mxu0 %v1167
    %1185 = vmatprep.subr.mxu0 0.0
    %1186 = vmatpush1.msra.mxu0 %v1168
    %1187 = vmatprep.subr.mxu0 0.0
    %1188 = vmatpush1.msra.mxu0 %v1169
    %1189 = vmatprep.subr.mxu0 0.0
    %1190 = vmatpush1.msra.mxu0 %v1170
    %1191 = vmatprep.subr.mxu0 0.0
    %1192 = vmatpush1.msra.mxu0 %v1171
    %1193 = vmatprep.subr.mxu0 0.0
    %1194 = vmatpush1.msra.mxu0 %v1172
    %1195 = vmatprep.subr.mxu0 0.0
    %1196 = vmatpush1.msra.mxu0 %v1173
    %1197 = vmatprep.subr.mxu0 0.0
    %1198 = vmatpush1.msra.mxu0 %v1174
    %1199 = vmatprep.subr.mxu0 0.0
    %1200 = vmatpush1.msra.mxu0 %v1175
    %1201 = vmatprep.subr.mxu0 0.0
    %1202 = vmatpush1.msra.mxu0 %v1176
    %1203 = vmatprep.subr.mxu0 0.0
    %1204 = vmatpush1.msra.mxu0 %v1177
    %1205 = vmatprep.subr.mxu0 0.0
    %1206 = vmatpush1.msra.mxu0 %v1178
    %1207 = vmatprep.subr.mxu0 0.0
    %1208 = vmatpush1.msra.mxu0 %v1179
    %1209 = vmatprep.subr.mxu0 0.0
    %1210 = vmatpush1.msra.mxu0 %v1180
    %1211 = vmatprep.subr.mxu0 0.0
    %1212 = vmatpush1.msra.mxu0 %v1181
    %1213 = vmatprep.subr.mxu0 0.0
    %1214 = vmatpush1.msra.mxu0 %v1182
    %1215 = vmatprep.subr.mxu0 0.0
    %1216 = vmatpush1.msra.mxu0 0.0
    %1217 = vmatprep.subr.mxu0 0.0
    %1218 = vmatpush1.msra.mxu0 0.0
    %1219 = vmatprep.subr.mxu0 0.0
    %1220 = vmatpush1.msra.mxu0 0.0
    %1221 = vmatprep.subr.mxu0 0.0
    %1222 = vmatpush1.msra.mxu0 0.0
    %1223 = vmatprep.subr.mxu0 0.0
    %1224 = vmatpush1.msra.mxu0 0.0
    %1225 = vmatprep.subr.mxu0 0.0
    %1226 = vmatpush1.msra.mxu0 0.0
    %1227 = vmatprep.subr.mxu0 0.0
    %1228 = vmatpush1.msra.mxu0 0.0
    %1229 = vmatprep.subr.mxu0 0.0
    %1230 = vmatpush1.msra.mxu0 0.0
    %1231 = vmatprep.subr.mxu0 0.0
    %1232 = vmatpush1.msra.mxu0 0.0
    %1233 = vmatprep.subr.mxu0 0.0
    %1234 = vmatpush1.msra.mxu0 0.0
    %1235 = vmatprep.subr.mxu0 0.0
    %1236 = vmatpush1.msra.mxu0 0.0
    %1237 = vmatprep.subr.mxu0 0.0
    %1238 = vmatpush1.msra.mxu0 0.0
    %1239 = vmatprep.subr.mxu0 0.0
    %1240 = vmatpush1.msra.mxu0 0.0
    %1241 = vmatprep.subr.mxu0 0.0
    %1242 = vmatpush1.msra.mxu0 0.0
    %1243 = vmatprep.subr.mxu0 0.0
    %1244 = vmatpush1.msra.mxu0 0.0
    %1245 = vmatprep.subr.mxu0 0.0
    %1246 = vmatpush1.msra.mxu0 0.0
    %1247 = vmatprep.mubr.f32.mxu0 0.0
    %1248 = vmatmul.mubr.f32.gmra.mrb[0].mxu0 %v1165
    %v1249 = vpop.f32.mrb[0].mxu0
    %v1250 = vadd.f32 0.0, %v1249
    %v1251 = vpop.f32.mrb[0].mxu0
    %1252 = vmatprep.mubr.f32.mxu0 0.0
    %1253 = vmatmul.mubr.f32.gmra.mrb[0].mxu0 %v1166
    %v1254 = vpop.f32.mrb[0].mxu0
    %v1255 = vadd.f32 0.0, %v1254
    %v1256 = vpop.f32.mrb[0].mxu0
    %1257 = vdwg.mxu0
    %v1258 = vld [vmem:[%s11] sm:$0xff]
    %v1259 = vld [vmem:[%s11 + $0x8] sm:$0xff]
    %v1260 = vld [vmem:[%s11 + $0x10] sm:$0xff]
    %v1261 = vld [vmem:[%s11 + $0x18] sm:$0xff]
    %v1262 = vld [vmem:[%s11 + $0x20] sm:$0xff]
    %v1263 = vld [vmem:[%s11 + $0x28] sm:$0xff]
    %v1264 = vld [vmem:[%s11 + $0x30] sm:$0xff]
    %v1265 = vld [vmem:[%s11 + $0x38] sm:$0xff]
    %v1266 = vld [vmem:[%s11 + $0x40] sm:$0xff]
    %v1267 = vld [vmem:[%s11 + $0x48] sm:$0xff]
    %v1268 = vld [vmem:[%s11 + $0x50] sm:$0xff]
    %v1269 = vld [vmem:[%s11 + $0x58] sm:$0xff]
    %v1270 = vld [vmem:[%s11 + $0x60] sm:$0xff]
    %v1271 = vld [vmem:[%s11 + $0x68] sm:$0xff]
    %v1272 = vld [vmem:[%s11 + $0x70] sm:$0xff]
    %v1273 = vld [vmem:[%s11 + $0x78] sm:$0xff]
    %1274 = vmatprep.subr.mxu0 0.0
    %1275 = vmatpush1.msra.mxu0 %v1258
    %1276 = vmatprep.subr.mxu0 0.0
    %1277 = vmatpush1.msra.mxu0 %v1259
    %1278 = vmatprep.subr.mxu0 0.0
    %1279 = vmatpush1.msra.mxu0 %v1260
    %1280 = vmatprep.subr.mxu0 0.0
    %1281 = vmatpush1.msra.mxu0 %v1261
    %1282 = vmatprep.subr.mxu0 0.0
    %1283 = vmatpush1.msra.mxu0 %v1262
    %1284 = vmatprep.subr.mxu0 0.0
    %1285 = vmatpush1.msra.mxu0 %v1263
    %1286 = vmatprep.subr.mxu0 0.0
    %1287 = vmatpush1.msra.mxu0 %v1264
    %1288 = vmatprep.subr.mxu0 0.0
    %1289 = vmatpush1.msra.mxu0 %v1265
    %1290 = vmatprep.subr.mxu0 0.0
    %1291 = vmatpush1.msra.mxu0 %v1266
    %1292 = vmatprep.subr.mxu0 0.0
    %1293 = vmatpush1.msra.mxu0 %v1267
    %1294 = vmatprep.subr.mxu0 0.0
    %1295 = vmatpush1.msra.mxu0 %v1268
    %1296 = vmatprep.subr.mxu0 0.0
    %1297 = vmatpush1.msra.mxu0 %v1269
    %1298 = vmatprep.subr.mxu0 0.0
    %1299 = vmatpush1.msra.mxu0 %v1270
    %1300 = vmatprep.subr.mxu0 0.0
    %1301 = vmatpush1.msra.mxu0 %v1271
    %1302 = vmatprep.subr.mxu0 0.0
    %1303 = vmatpush1.msra.mxu0 %v1272
    %1304 = vmatprep.subr.mxu0 0.0
    %1305 = vmatpush1.msra.mxu0 %v1273
    %1306 = vmatprep.subr.mxu0 0.0
    %1307 = vmatpush1.msra.mxu0 0.0
    %1308 = vmatprep.subr.mxu0 0.0
    %1309 = vmatpush1.msra.mxu0 0.0
    %1310 = vmatprep.subr.mxu0 0.0
    %1311 = vmatpush1.msra.mxu0 0.0
    %1312 = vmatprep.subr.mxu0 0.0
    %1313 = vmatpush1.msra.mxu0 0.0
    %1314 = vmatprep.subr.mxu0 0.0
    %1315 = vmatpush1.msra.mxu0 0.0
    %1316 = vmatprep.subr.mxu0 0.0
    %1317 = vmatpush1.msra.mxu0 0.0
    %1318 = vmatprep.subr.mxu0 0.0
    %1319 = vmatpush1.msra.mxu0 0.0
    %1320 = vmatprep.subr.mxu0 0.0
    %1321 = vmatpush1.msra.mxu0 0.0
    %1322 = vmatprep.subr.mxu0 0.0
    %1323 = vmatpush1.msra.mxu0 0.0
    %1324 = vmatprep.subr.mxu0 0.0
    %1325 = vmatpush1.msra.mxu0 0.0
    %1326 = vmatprep.subr.mxu0 0.0
    %1327 = vmatpush1.msra.mxu0 0.0
    %1328 = vmatprep.subr.mxu0 0.0
    %1329 = vmatpush1.msra.mxu0 0.0
    %1330 = vmatprep.subr.mxu0 0.0
    %1331 = vmatpush1.msra.mxu0 0.0
    %1332 = vmatprep.subr.mxu0 0.0
    %1333 = vmatpush1.msra.mxu0 0.0
    %1334 = vmatprep.subr.mxu0 0.0
    %1335 = vmatpush1.msra.mxu0 0.0
    %1336 = vmatprep.subr.mxu0 0.0
    %1337 = vmatpush1.msra.mxu0 0.0
    %1338 = vmatprep.mubr.f32.mxu0 0.0
    %1339 = vmatmul.mubr.f32.gmra.mrb[0].mxu0 %v1250
    %v1340 = vpop.f32.mrb[0].mxu0
    %v1341 = vadd.f32 0.0, %v1340
    %v1342 = vpop.f32.mrb[0].mxu0
    %1343 = vmatprep.mubr.f32.mxu0 0.0
    %1344 = vmatmul.mubr.f32.gmra.mrb[0].mxu0 %v1255
    %v1345 = vpop.f32.mrb[0].mxu0
    %v1346 = vadd.f32 0.0, %v1345
    %v1347 = vpop.f32.mrb[0].mxu0
    %1348 = vdwg.mxu0
    %1349 = vxpose.xlu0.b32.start [1/16] %v1341, 128
    %1350 = vxpose.xlu0.b32.cont [2/16] %v1346, 128
    %1351 = vxpose.xlu0.b32.cont [3/16] 0.0, 128
    %1352 = vxpose.xlu0.b32.cont [4/16] 0.0, 128
    %1353 = vxpose.xlu0.b32.cont [5/16] 0.0, 128
    %1354 = vxpose.xlu0.b32.cont [6/16] 0.0, 128
    %1355 = vxpose.xlu0.b32.cont [7/16] 0.0, 128
    %1356 = vxpose.xlu0.b32.cont [8/16] 0.0, 128
    %1357 = vxpose.xlu0.b32.cont [9/16] 0.0, 128
    %1358 = vxpose.xlu0.b32.cont [10/16] 0.0, 128
    %1359 = vxpose.xlu0.b32.cont [11/16] 0.0, 128
    %1360 = vxpose.xlu0.b32.cont [12/16] 0.0, 128
    %1361 = vxpose.xlu0.b32.cont [13/16] 0.0, 128
    %1362 = vxpose.xlu0.b32.cont [14/16] 0.0, 128
    %1363 = vxpose.xlu0.b32.cont [15/16] 0.0, 128
    %1364 = vxpose.xlu0.b32.end [16/16] 0.0, 128
    %v1365 = vpop.trf.xlu0
    %v1366 = vpop.trf.xlu0
    %v1367 = vpop.trf.xlu0
    %v1368 = vpop.trf.xlu0
    %v1369 = vpop.trf.xlu0
    %v1370 = vpop.trf.xlu0
    %v1371 = vpop.trf.xlu0
    %v1372 = vpop.trf.xlu0
    %v1373 = vpop.trf.xlu0
    %v1374 = vpop.trf.xlu0
    %v1375 = vpop.trf.xlu0
    %v1376 = vpop.trf.xlu0
    %v1377 = vpop.trf.xlu0
    %v1378 = vpop.trf.xlu0
    %v1379 = vpop.trf.xlu0
    %v1380 = vpop.trf.xlu0
    %1382 = vset.pattern.permute.xlu0 2
    %1383 = vperm.xlu0 %1382, %v1341
    %v1384 = vpop.permute.xlu0 %1383
    %1387 = vset.pattern.permute.xlu0 2
    %1388 = vperm.xlu0 %1387, %v1346
    %v1389 = vpop.permute.xlu0 %1388
    %v1391 = vlaneseq
    %v1392 = vshrl.u32 %v1391, 7
    %v1393 = vsub.s32 0, %v1392
    %v1394 = vrot.slane %v1365, %v1393
    %v1395 = vadd.f32 %v1384, %v1394
    %v1396 = vadd.f32 %v1389, %v1394
    %vm1397 = vcmp.gt.f32.partialorder %v1395, 0.0
    %vm1398 = vcmp.gt.f32.partialorder %v1396, 0.0
    %v1399 = vmul.f32 %v1395, 0.2
    %v1400 = vmul.f32 %v1396, 0.2
    %v1401 = vsel %vm1397, %v1395, %v1399
    %v1402 = vsel %vm1398, %v1396, %v1400
    %v1403 = vadd.f32 %v1401, %v66
    %v1404 = vadd.f32 %v1402, %v67
    %v1405 = vsel %vm300, %v1403, -inf
    %1406 = vmax.xlane.f32.xlu0 %v1405
    %v1407 = vpop.xlane.xlu0 %1406
    %v1408 = vsel %vm300, %v1404, -inf
    %1409 = vmax.xlane.f32.xlu0 %v1408
    %v1410 = vpop.xlane.xlu0 %1409
    %v1411 = vsub.f32 %v1403, %v1407
    %v1412 = vsub.f32 %v1404, %v1410
    %v1413 = vmul.f32 %v1411, 1.442695
    %v1414 = vpow.pop %v1413
    %v1415 = vmul.f32 %v1412, 1.442695
    %v1416 = vpow.pop %v1415
    %v1417 = vsel %vm300, %v1414, 0.0
    %1418 = vadd.xlane.f32.xlu0 %v1417
    %v1419 = vpop.xlane.xlu0 %1418
    %v1420 = vsel %vm300, %v1416, 0.0
    %1421 = vadd.xlane.f32.xlu0 %v1420
    %v1422 = vpop.xlane.xlu0 %1421
    %v1423 = vrcp.pop %v1419
    %v1424 = vmul.f32 %v1414, %v1423
    %v1425 = vrcp.pop %v1422
    %v1426 = vmul.f32 %v1416, %v1425
    %v1428 = vsel %vm300, %v1424, 0
    %v1431 = vsel %vm300, %v1426, 0
    %1433 = vmatprep.subr.mxu0 0.0
    %1434 = vmatpush1.msra.mxu0 %v1250
    %1435 = vmatprep.subr.mxu0 0.0
    %1436 = vmatpush1.msra.mxu0 %v1255
    %1437 = vmatprep.subr.mxu0 0.0
    %1438 = vmatpush1.msra.mxu0 0.0
    %1439 = vmatprep.subr.mxu0 0.0
    %1440 = vmatpush1.msra.mxu0 0.0
    %1441 = vmatprep.subr.mxu0 0.0
    %1442 = vmatpush1.msra.mxu0 0.0
    %1443 = vmatprep.subr.mxu0 0.0
    %1444 = vmatpush1.msra.mxu0 0.0
    %1445 = vmatprep.subr.mxu0 0.0
    %1446 = vmatpush1.msra.mxu0 0.0
    %1447 = vmatprep.subr.mxu0 0.0
    %1448 = vmatpush1.msra.mxu0 0.0
    %1449 = vmatprep.subr.mxu0 0.0
    %1450 = vmatpush1.msra.mxu0 0.0
    %1451 = vmatprep.subr.mxu0 0.0
    %1452 = vmatpush1.msra.mxu0 0.0
    %1453 = vmatprep.subr.mxu0 0.0
    %1454 = vmatpush1.msra.mxu0 0.0
    %1455 = vmatprep.subr.mxu0 0.0
    %1456 = vmatpush1.msra.mxu0 0.0
    %1457 = vmatprep.subr.mxu0 0.0
    %1458 = vmatpush1.msra.mxu0 0.0
    %1459 = vmatprep.subr.mxu0 0.0
    %1460 = vmatpush1.msra.mxu0 0.0
    %1461 = vmatprep.subr.mxu0 0.0
    %1462 = vmatpush1.msra.mxu0 0.0
    %1463 = vmatprep.subr.mxu0 0.0
    %1464 = vmatpush1.msra.mxu0 0.0
    %1465 = vmatprep.subr.mxu0 0.0
    %1466 = vmatpush1.msra.mxu0 0.0
    %1467 = vmatprep.subr.mxu0 0.0
    %1468 = vmatpush1.msra.mxu0 0.0
    %1469 = vmatprep.subr.mxu0 0.0
    %1470 = vmatpush1.msra.mxu0 0.0
    %1471 = vmatprep.subr.mxu0 0.0
    %1472 = vmatpush1.msra.mxu0 0.0
    %1473 = vmatprep.subr.mxu0 0.0
    %1474 = vmatpush1.msra.mxu0 0.0
    %1475 = vmatprep.subr.mxu0 0.0
    %1476 = vmatpush1.msra.mxu0 0.0
    %1477 = vmatprep.subr.mxu0 0.0
    %1478 = vmatpush1.msra.mxu0 0.0
    %1479 = vmatprep.subr.mxu0 0.0
    %1480 = vmatpush1.msra.mxu0 0.0
    %1481 = vmatprep.subr.mxu0 0.0
    %1482 = vmatpush1.msra.mxu0 0.0
    %1483 = vmatprep.subr.mxu0 0.0
    %1484 = vmatpush1.msra.mxu0 0.0
    %1485 = vmatprep.subr.mxu0 0.0
    %1486 = vmatpush1.msra.mxu0 0.0
    %1487 = vmatprep.subr.mxu0 0.0
    %1488 = vmatpush1.msra.mxu0 0.0
    %1489 = vmatprep.subr.mxu0 0.0
    %1490 = vmatpush1.msra.mxu0 0.0
    %1491 = vmatprep.subr.mxu0 0.0
    %1492 = vmatpush1.msra.mxu0 0.0
    %1493 = vmatprep.subr.mxu0 0.0
    %1494 = vmatpush1.msra.mxu0 0.0
    %1495 = vmatprep.subr.mxu0 0.0
    %1496 = vmatpush1.msra.mxu0 0.0
    %1497 = vmatprep.mubr.f32.mxu0 0.0
    %1498 = vmatmul.mubr.f32.gmra.mrb[0].mxu0 %v1428
    %v1499 = vpop.f32.mrb[0].mxu0
    %v1500 = vadd.f32 0.0, %v1499
    %v1501 = vpop.f32.mrb[0].mxu0
    %1502 = vmatprep.mubr.f32.mxu0 0.0
    %1503 = vmatmul.mubr.f32.gmra.mrb[0].mxu0 %v1431
    %v1504 = vpop.f32.mrb[0].mxu0
    %v1505 = vadd.f32 0.0, %v1504
    %v1506 = vpop.f32.mrb[0].mxu0
    %1507 = vdwg.mxu0
    %1508 = vst.msk [vmem:[#allocation2] sm:$0xff] %vm404, %v1500
    %1509 = vst.msk [vmem:[#allocation2 + $0x8] sm:$0xff] %vm404, %v1505
    %1510 = vrot.lane.b32.xlu0 %v1341, 127
    %v1511 = vpop.permute.xlu0 %1510
    %1512 = vrot.lane.b32.xlu0 %v1346, 127
    %v1513 = vpop.permute.xlu0 %1512
    %1516 = vxpose.xlu0.b32.start [1/16] %v1511, 128
    %1517 = vxpose.xlu0.b32.cont [2/16] %v1513, 128
    %1518 = vxpose.xlu0.b32.cont [3/16] 0.0, 128
    %1519 = vxpose.xlu0.b32.cont [4/16] 0.0, 128
    %1520 = vxpose.xlu0.b32.cont [5/16] 0.0, 128
    %1521 = vxpose.xlu0.b32.cont [6/16] 0.0, 128
    %1522 = vxpose.xlu0.b32.cont [7/16] 0.0, 128
    %1523 = vxpose.xlu0.b32.cont [8/16] 0.0, 128
    %1524 = vxpose.xlu0.b32.cont [9/16] 0.0, 128
    %1525 = vxpose.xlu0.b32.cont [10/16] 0.0, 128
    %1526 = vxpose.xlu0.b32.cont [11/16] 0.0, 128
    %1527 = vxpose.xlu0.b32.cont [12/16] 0.0, 128
    %1528 = vxpose.xlu0.b32.cont [13/16] 0.0, 128
    %1529 = vxpose.xlu0.b32.cont [14/16] 0.0, 128
    %1530 = vxpose.xlu0.b32.cont [15/16] 0.0, 128
    %1531 = vxpose.xlu0.b32.end [16/16] 0.0, 128
    %v1532 = vpop.trf.xlu0
    %v1533 = vpop.trf.xlu0
    %v1534 = vpop.trf.xlu0
    %v1535 = vpop.trf.xlu0
    %v1536 = vpop.trf.xlu0
    %v1537 = vpop.trf.xlu0
    %v1538 = vpop.trf.xlu0
    %v1539 = vpop.trf.xlu0
    %v1540 = vpop.trf.xlu0
    %v1541 = vpop.trf.xlu0
    %v1542 = vpop.trf.xlu0
    %v1543 = vpop.trf.xlu0
    %v1544 = vpop.trf.xlu0
    %v1545 = vpop.trf.xlu0
    %v1546 = vpop.trf.xlu0
    %v1547 = vpop.trf.xlu0
    %1548 = vset.pattern.permute.xlu0 3
    %1549 = vperm.xlu0 %1548, %v1341
    %v1550 = vpop.permute.xlu0 %1549
    %1552 = vset.pattern.permute.xlu0 3
    %1553 = vperm.xlu0 %1552, %v1346
    %v1554 = vpop.permute.xlu0 %1553
    %v1556 = vlaneseq
    %v1557 = vshrl.u32 %v1556, 7
    %v1558 = vsub.s32 0, %v1557
    %v1559 = vrot.slane %v1532, %v1558
    %v1560 = vadd.f32 %v1550, %v1559
    %v1561 = vadd.f32 %v1554, %v1559
    %vm1562 = vcmp.gt.f32.partialorder %v1560, 0.0
    %vm1563 = vcmp.gt.f32.partialorder %v1561, 0.0
    %v1564 = vmul.f32 %v1560, 0.2
    %v1565 = vmul.f32 %v1561, 0.2
    %v1566 = vsel %vm1562, %v1560, %v1564
    %v1567 = vsel %vm1563, %v1561, %v1565
    %v1568 = vadd.f32 %v1566, %v66
    %v1569 = vadd.f32 %v1567, %v67
    %v1570 = vsel %vm300, %v1568, -inf
    %1571 = vmax.xlane.f32.xlu0 %v1570
    %v1572 = vpop.xlane.xlu0 %1571
    %v1573 = vsel %vm300, %v1569, -inf
    %1574 = vmax.xlane.f32.xlu0 %v1573
    %v1575 = vpop.xlane.xlu0 %1574
    %v1576 = vsub.f32 %v1568, %v1572
    %v1577 = vsub.f32 %v1569, %v1575
    %v1578 = vmul.f32 %v1576, 1.442695
    %v1579 = vpow.pop %v1578
    %v1580 = vmul.f32 %v1577, 1.442695
    %v1581 = vpow.pop %v1580
    %v1582 = vsel %vm300, %v1579, 0.0
    %1583 = vadd.xlane.f32.xlu0 %v1582
    %v1584 = vpop.xlane.xlu0 %1583
    %v1585 = vsel %vm300, %v1581, 0.0
    %1586 = vadd.xlane.f32.xlu0 %v1585
    %v1587 = vpop.xlane.xlu0 %1586
    %v1588 = vrcp.pop %v1584
    %v1589 = vmul.f32 %v1579, %v1588
    %v1590 = vrcp.pop %v1587
    %v1591 = vmul.f32 %v1581, %v1590
    %1594 = vrot.lane.b32.xlu0 %v1250, 96
    %v1595 = vpop.permute.xlu0 %1594
    %1596 = vrot.lane.b32.xlu0 %v1255, 96
    %v1597 = vpop.permute.xlu0 %1596
    %v1601 = vsel %vm300, %v1589, 0
    %v1604 = vsel %vm300, %v1591, 0
    %1606 = vmatprep.subr.mxu0 0.0
    %1607 = vmatpush1.msra.mxu0 %v1595
    %1608 = vmatprep.subr.mxu0 0.0
    %1609 = vmatpush1.msra.mxu0 %v1597
    %1610 = vmatprep.subr.mxu0 0.0
    %1611 = vmatpush1.msra.mxu0 0.0
    %1612 = vmatprep.subr.mxu0 0.0
    %1613 = vmatpush1.msra.mxu0 0.0
    %1614 = vmatprep.subr.mxu0 0.0
    %1615 = vmatpush1.msra.mxu0 0.0
    %1616 = vmatprep.subr.mxu0 0.0
    %1617 = vmatpush1.msra.mxu0 0.0
    %1618 = vmatprep.subr.mxu0 0.0
    %1619 = vmatpush1.msra.mxu0 0.0
    %1620 = vmatprep.subr.mxu0 0.0
    %1621 = vmatpush1.msra.mxu0 0.0
    %1622 = vmatprep.subr.mxu0 0.0
    %1623 = vmatpush1.msra.mxu0 0.0
    %1624 = vmatprep.subr.mxu0 0.0
    %1625 = vmatpush1.msra.mxu0 0.0
    %1626 = vmatprep.subr.mxu0 0.0
    %1627 = vmatpush1.msra.mxu0 0.0
    %1628 = vmatprep.subr.mxu0 0.0
    %1629 = vmatpush1.msra.mxu0 0.0
    %1630 = vmatprep.subr.mxu0 0.0
    %1631 = vmatpush1.msra.mxu0 0.0
    %1632 = vmatprep.subr.mxu0 0.0
    %1633 = vmatpush1.msra.mxu0 0.0
    %1634 = vmatprep.subr.mxu0 0.0
    %1635 = vmatpush1.msra.mxu0 0.0
    %1636 = vmatprep.subr.mxu0 0.0
    %1637 = vmatpush1.msra.mxu0 0.0
    %1638 = vmatprep.subr.mxu0 0.0
    %1639 = vmatpush1.msra.mxu0 0.0
    %1640 = vmatprep.subr.mxu0 0.0
    %1641 = vmatpush1.msra.mxu0 0.0
    %1642 = vmatprep.subr.mxu0 0.0
    %1643 = vmatpush1.msra.mxu0 0.0
    %1644 = vmatprep.subr.mxu0 0.0
    %1645 = vmatpush1.msra.mxu0 0.0
    %1646 = vmatprep.subr.mxu0 0.0
    %1647 = vmatpush1.msra.mxu0 0.0
    %1648 = vmatprep.subr.mxu0 0.0
    %1649 = vmatpush1.msra.mxu0 0.0
    %1650 = vmatprep.subr.mxu0 0.0
    %1651 = vmatpush1.msra.mxu0 0.0
    %1652 = vmatprep.subr.mxu0 0.0
    %1653 = vmatpush1.msra.mxu0 0.0
    %1654 = vmatprep.subr.mxu0 0.0
    %1655 = vmatpush1.msra.mxu0 0.0
    %1656 = vmatprep.subr.mxu0 0.0
    %1657 = vmatpush1.msra.mxu0 0.0
    %1658 = vmatprep.subr.mxu0 0.0
    %1659 = vmatpush1.msra.mxu0 0.0
    %1660 = vmatprep.subr.mxu0 0.0
    %1661 = vmatpush1.msra.mxu0 0.0
    %1662 = vmatprep.subr.mxu0 0.0
    %1663 = vmatpush1.msra.mxu0 0.0
    %1664 = vmatprep.subr.mxu0 0.0
    %1665 = vmatpush1.msra.mxu0 0.0
    %1666 = vmatprep.subr.mxu0 0.0
    %1667 = vmatpush1.msra.mxu0 0.0
    %1668 = vmatprep.subr.mxu0 0.0
    %1669 = vmatpush1.msra.mxu0 0.0
    %1670 = vmatprep.mubr.f32.mxu0 0.0
    %1671 = vmatmul.mubr.f32.gmra.mrb[0].mxu0 %v1601
    %v1672 = vpop.f32.mrb[0].mxu0
    %v1673 = vadd.f32 0.0, %v1672
    %v1674 = vpop.f32.mrb[0].mxu0
    %1675 = vmatprep.mubr.f32.mxu0 0.0
    %1676 = vmatmul.mubr.f32.gmra.mrb[0].mxu0 %v1604
    %v1677 = vpop.f32.mrb[0].mxu0
    %v1678 = vadd.f32 0.0, %v1677
    %v1679 = vpop.f32.mrb[0].mxu0
    %1680 = vdwg.mxu0
    %1683 = vrot.lane.b32.xlu0 %v1673, 32
    %v1684 = vpop.permute.xlu0 %1683
    %1685 = vrot.lane.b32.xlu0 %v1678, 32
    %v1686 = vpop.permute.xlu0 %1685
    %1689 = vst.msk [vmem:[#allocation2] sm:$0xff] %vm586, %v1684
    %1690 = vst.msk [vmem:[#allocation2 + $0x8] sm:$0xff] %vm586, %v1686
    %v1691 = vld [vmem:[#allocation2] sm:$0xff]
    %v1692 = vld [vmem:[#allocation2 + $0x8] sm:$0xff]
    %v1693 = vld [vmem:[%s12] sm:$0x1]
    %v1695 = vlaneseq
    %v1696 = vshrl.u32 %v1695, 7
    %v1697 = vsub.s32 0, %v1696
    %v1698 = vrot.slane %v1693, %v1697
    %v1700 = vadd.f32 %v1691, %v1698
    %v1701 = vadd.f32 %v1692, %v1698
    %vm1702 = vcmp.gt.f32.partialorder %v1700, 0.0
    %vm1703 = vcmp.gt.f32.partialorder %v1701, 0.0
    %v1704 = vmin.f32 %v1700, 0.0
    %v1705 = vmin.f32 %v1701, 0.0
    %v1706 = vmul.f32 %v1704, 1.442695
    %v1707 = vpow.pop %v1706
    %v1708 = vmul.f32 %v1705, 1.442695
    %v1709 = vpow.pop %v1708
    %v1710 = vsub.f32 %v1707, 1.0
    %v1711 = vsub.f32 %v1709, 1.0
    %v1712 = vsel %vm1702, %v1700, %v1710
    %v1713 = vsel %vm1703, %v1701, %v1711
    %1714 = vst [vmem:[#allocation2] sm:$0xff] %v1712
    %1715 = vst [vmem:[#allocation2 + $0x8] sm:$0xff] %v1713
    %v1716 = vld [vmem:[%s2] sm:$0x3]
    %v1717 = vld [vmem:[#allocation2] sm:$0xff]
    %v1718 = vld [vmem:[#allocation2 + $0x8] sm:$0xff]
    %v1720 = vsel %vm300, %v1716, 0
    %1722 = vmatprep.subr.mxu0 0.0
    %1723 = vmatpush1.msra.mxu0 %v1717
    %1724 = vmatprep.subr.mxu0 0.0
    %1725 = vmatpush1.msra.mxu0 %v1718
    %1726 = vmatprep.subr.mxu0 0.0
    %1727 = vmatpush1.msra.mxu0 0.0
    %1728 = vmatprep.subr.mxu0 0.0
    %1729 = vmatpush1.msra.mxu0 0.0
    %1730 = vmatprep.subr.mxu0 0.0
    %1731 = vmatpush1.msra.mxu0 0.0
    %1732 = vmatprep.subr.mxu0 0.0
    %1733 = vmatpush1.msra.mxu0 0.0
    %1734 = vmatprep.subr.mxu0 0.0
    %1735 = vmatpush1.msra.mxu0 0.0
    %1736 = vmatprep.subr.mxu0 0.0
    %1737 = vmatpush1.msra.mxu0 0.0
    %1738 = vmatprep.subr.mxu0 0.0
    %1739 = vmatpush1.msra.mxu0 0.0
    %1740 = vmatprep.subr.mxu0 0.0
    %1741 = vmatpush1.msra.mxu0 0.0
    %1742 = vmatprep.subr.mxu0 0.0
    %1743 = vmatpush1.msra.mxu0 0.0
    %1744 = vmatprep.subr.mxu0 0.0
    %1745 = vmatpush1.msra.mxu0 0.0
    %1746 = vmatprep.subr.mxu0 0.0
    %1747 = vmatpush1.msra.mxu0 0.0
    %1748 = vmatprep.subr.mxu0 0.0
    %1749 = vmatpush1.msra.mxu0 0.0
    %1750 = vmatprep.subr.mxu0 0.0
    %1751 = vmatpush1.msra.mxu0 0.0
    %1752 = vmatprep.subr.mxu0 0.0
    %1753 = vmatpush1.msra.mxu0 0.0
    %1754 = vmatprep.subr.mxu0 0.0
    %1755 = vmatpush1.msra.mxu0 0.0
    %1756 = vmatprep.subr.mxu0 0.0
    %1757 = vmatpush1.msra.mxu0 0.0
    %1758 = vmatprep.subr.mxu0 0.0
    %1759 = vmatpush1.msra.mxu0 0.0
    %1760 = vmatprep.subr.mxu0 0.0
    %1761 = vmatpush1.msra.mxu0 0.0
    %1762 = vmatprep.subr.mxu0 0.0
    %1763 = vmatpush1.msra.mxu0 0.0
    %1764 = vmatprep.subr.mxu0 0.0
    %1765 = vmatpush1.msra.mxu0 0.0
    %1766 = vmatprep.subr.mxu0 0.0
    %1767 = vmatpush1.msra.mxu0 0.0
    %1768 = vmatprep.subr.mxu0 0.0
    %1769 = vmatpush1.msra.mxu0 0.0
    %1770 = vmatprep.subr.mxu0 0.0
    %1771 = vmatpush1.msra.mxu0 0.0
    %1772 = vmatprep.subr.mxu0 0.0
    %1773 = vmatpush1.msra.mxu0 0.0
    %1774 = vmatprep.subr.mxu0 0.0
    %1775 = vmatpush1.msra.mxu0 0.0
    %1776 = vmatprep.subr.mxu0 0.0
    %1777 = vmatpush1.msra.mxu0 0.0
    %1778 = vmatprep.subr.mxu0 0.0
    %1779 = vmatpush1.msra.mxu0 0.0
    %1780 = vmatprep.subr.mxu0 0.0
    %1781 = vmatpush1.msra.mxu0 0.0
    %1782 = vmatprep.subr.mxu0 0.0
    %1783 = vmatpush1.msra.mxu0 0.0
    %1784 = vmatprep.subr.mxu0 0.0
    %1785 = vmatpush1.msra.mxu0 0.0
    %1786 = vmatprep.mubr.f32.mxu0 0.0
    %1787 = vmatmul.mubr.f32.gmra.mrb[0].mxu0 %v1720
    %v1788 = vpop.f32.mrb[0].mxu0
    %v1789 = vadd.f32 0.0, %v1788
    %v1790 = vpop.f32.mrb[0].mxu0
    %1791 = vdwg.mxu0
    %v1792 = vld [vmem:[%s13] sm:$0xff]
    %v1793 = vld [vmem:[%s13 + $0x8] sm:$0xff]
    %v1794 = vld [vmem:[%s13 + $0x10] sm:$0xff]
    %v1795 = vld [vmem:[%s13 + $0x18] sm:$0xff]
    %v1796 = vld [vmem:[%s13 + $0x20] sm:$0xff]
    %v1797 = vld [vmem:[%s13 + $0x28] sm:$0xff]
    %v1798 = vld [vmem:[%s13 + $0x30] sm:$0xff]
    %v1799 = vld [vmem:[%s13 + $0x38] sm:$0xff]
    %v1800 = vld [vmem:[%s13 + $0x40] sm:$0xff]
    %v1801 = vld [vmem:[%s13 + $0x48] sm:$0xff]
    %v1802 = vld [vmem:[%s13 + $0x50] sm:$0xff]
    %v1803 = vld [vmem:[%s13 + $0x58] sm:$0xff]
    %v1804 = vld [vmem:[%s13 + $0x60] sm:$0xff]
    %v1805 = vld [vmem:[%s13 + $0x68] sm:$0xff]
    %v1806 = vld [vmem:[%s13 + $0x70] sm:$0xff]
    %v1807 = vld [vmem:[%s13 + $0x78] sm:$0xff]
    %v1808 = vld [vmem:[%s3] sm:$0x3]
    %v1809 = vld [vmem:[%s14] sm:$0x3f]
    %vm1810 = vcmask 48128
    %v1812 = vsel %vm1810, %v1808, 0
    %vm1814 = vcmask 1045504
    %v1816 = vsel %vm1814, %v1809, 0
    %1818 = vmatprep.subr.mxu0 0.0
    %1819 = vmatpush1.msra.mxu0 %v1816
    %1820 = vmatprep.subr.mxu0 0.0
    %1821 = vmatpush1.msra.mxu0 0.0
    %1822 = vmatprep.subr.mxu0 0.0
    %1823 = vmatpush1.msra.mxu0 0.0
    %1824 = vmatprep.subr.mxu0 0.0
    %1825 = vmatpush1.msra.mxu0 0.0
    %1826 = vmatprep.subr.mxu0 0.0
    %1827 = vmatpush1.msra.mxu0 0.0
    %1828 = vmatprep.subr.mxu0 0.0
    %1829 = vmatpush1.msra.mxu0 0.0
    %1830 = vmatprep.subr.mxu0 0.0
    %1831 = vmatpush1.msra.mxu0 0.0
    %1832 = vmatprep.subr.mxu0 0.0
    %1833 = vmatpush1.msra.mxu0 0.0
    %1834 = vmatprep.subr.mxu0 0.0
    %1835 = vmatpush1.msra.mxu0 0.0
    %1836 = vmatprep.subr.mxu0 0.0
    %1837 = vmatpush1.msra.mxu0 0.0
    %1838 = vmatprep.subr.mxu0 0.0
    %1839 = vmatpush1.msra.mxu0 0.0
    %1840 = vmatprep.subr.mxu0 0.0
    %1841 = vmatpush1.msra.mxu0 0.0
    %1842 = vmatprep.subr.mxu0 0.0
    %1843 = vmatpush1.msra.mxu0 0.0
    %1844 = vmatprep.subr.mxu0 0.0
    %1845 = vmatpush1.msra.mxu0 0.0
    %1846 = vmatprep.subr.mxu0 0.0
    %1847 = vmatpush1.msra.mxu0 0.0
    %1848 = vmatprep.subr.mxu0 0.0
    %1849 = vmatpush1.msra.mxu0 0.0
    %1850 = vmatprep.subr.mxu0 0.0
    %1851 = vmatpush1.msra.mxu0 0.0
    %1852 = vmatprep.subr.mxu0 0.0
    %1853 = vmatpush1.msra.mxu0 0.0
    %1854 = vmatprep.subr.mxu0 0.0
    %1855 = vmatpush1.msra.mxu0 0.0
    %1856 = vmatprep.subr.mxu0 0.0
    %1857 = vmatpush1.msra.mxu0 0.0
    %1858 = vmatprep.subr.mxu0 0.0
    %1859 = vmatpush1.msra.mxu0 0.0
    %1860 = vmatprep.subr.mxu0 0.0
    %1861 = vmatpush1.msra.mxu0 0.0
    %1862 = vmatprep.subr.mxu0 0.0
    %1863 = vmatpush1.msra.mxu0 0.0
    %1864 = vmatprep.subr.mxu0 0.0
    %1865 = vmatpush1.msra.mxu0 0.0
    %1866 = vmatprep.subr.mxu0 0.0
    %1867 = vmatpush1.msra.mxu0 0.0
    %1868 = vmatprep.subr.mxu0 0.0
    %1869 = vmatpush1.msra.mxu0 0.0
    %1870 = vmatprep.subr.mxu0 0.0
    %1871 = vmatpush1.msra.mxu0 0.0
    %1872 = vmatprep.subr.mxu0 0.0
    %1873 = vmatpush1.msra.mxu0 0.0
    %1874 = vmatprep.subr.mxu0 0.0
    %1875 = vmatpush1.msra.mxu0 0.0
    %1876 = vmatprep.subr.mxu0 0.0
    %1877 = vmatpush1.msra.mxu0 0.0
    %1878 = vmatprep.subr.mxu0 0.0
    %1879 = vmatpush1.msra.mxu0 0.0
    %1880 = vmatprep.subr.mxu0 0.0
    %1881 = vmatpush1.msra.mxu0 0.0
    %1882 = vmatprep.mubr.f32.mxu0 0.0
    %1883 = vmatmul.mubr.f32.gmra.mrb[0].mxu0 %v1812
    %v1884 = vpop.f32.mrb[0].mxu0
    %v1885 = vadd.f32 0.0, %v1884
    %v1886 = vpop.f32.mrb[0].mxu0
    %1887 = vdwg.mxu0
    %1888 = vmatprep.subr.mxu0 0.0
    %1889 = vmatpush1.msra.mxu0 %v1792
    %1890 = vmatprep.subr.mxu0 0.0
    %1891 = vmatpush1.msra.mxu0 %v1793
    %1892 = vmatprep.subr.mxu0 0.0
    %1893 = vmatpush1.msra.mxu0 %v1794
    %1894 = vmatprep.subr.mxu0 0.0
    %1895 = vmatpush1.msra.mxu0 %v1795
    %1896 = vmatprep.subr.mxu0 0.0
    %1897 = vmatpush1.msra.mxu0 %v1796
    %1898 = vmatprep.subr.mxu0 0.0
    %1899 = vmatpush1.msra.mxu0 %v1797
    %1900 = vmatprep.subr.mxu0 0.0
    %1901 = vmatpush1.msra.mxu0 %v1798
    %1902 = vmatprep.subr.mxu0 0.0
    %1903 = vmatpush1.msra.mxu0 %v1799
    %1904 = vmatprep.subr.mxu0 0.0
    %1905 = vmatpush1.msra.mxu0 %v1800
    %1906 = vmatprep.subr.mxu0 0.0
    %1907 = vmatpush1.msra.mxu0 %v1801
    %1908 = vmatprep.subr.mxu0 0.0
    %1909 = vmatpush1.msra.mxu0 %v1802
    %1910 = vmatprep.subr.mxu0 0.0
    %1911 = vmatpush1.msra.mxu0 %v1803
    %1912 = vmatprep.subr.mxu0 0.0
    %1913 = vmatpush1.msra.mxu0 %v1804
    %1914 = vmatprep.subr.mxu0 0.0
    %1915 = vmatpush1.msra.mxu0 %v1805
    %1916 = vmatprep.subr.mxu0 0.0
    %1917 = vmatpush1.msra.mxu0 %v1806
    %1918 = vmatprep.subr.mxu0 0.0
    %1919 = vmatpush1.msra.mxu0 %v1807
    %1920 = vmatprep.subr.mxu0 0.0
    %1921 = vmatpush1.msra.mxu0 0.0
    %1922 = vmatprep.subr.mxu0 0.0
    %1923 = vmatpush1.msra.mxu0 0.0
    %1924 = vmatprep.subr.mxu0 0.0
    %1925 = vmatpush1.msra.mxu0 0.0
    %1926 = vmatprep.subr.mxu0 0.0
    %1927 = vmatpush1.msra.mxu0 0.0
    %1928 = vmatprep.subr.mxu0 0.0
    %1929 = vmatpush1.msra.mxu0 0.0
    %1930 = vmatprep.subr.mxu0 0.0
    %1931 = vmatpush1.msra.mxu0 0.0
    %1932 = vmatprep.subr.mxu0 0.0
    %1933 = vmatpush1.msra.mxu0 0.0
    %1934 = vmatprep.subr.mxu0 0.0
    %1935 = vmatpush1.msra.mxu0 0.0
    %1936 = vmatprep.subr.mxu0 0.0
    %1937 = vmatpush1.msra.mxu0 0.0
    %1938 = vmatprep.subr.mxu0 0.0
    %1939 = vmatpush1.msra.mxu0 0.0
    %1940 = vmatprep.subr.mxu0 0.0
    %1941 = vmatpush1.msra.mxu0 0.0
    %1942 = vmatprep.subr.mxu0 0.0
    %1943 = vmatpush1.msra.mxu0 0.0
    %1944 = vmatprep.subr.mxu0 0.0
    %1945 = vmatpush1.msra.mxu0 0.0
    %1946 = vmatprep.subr.mxu0 0.0
    %1947 = vmatpush1.msra.mxu0 0.0
    %1948 = vmatprep.subr.mxu0 0.0
    %1949 = vmatpush1.msra.mxu0 0.0
    %1950 = vmatprep.subr.mxu0 0.0
    %1951 = vmatpush1.msra.mxu0 0.0
    %1952 = vmatprep.mubr.f32.mxu0 0.0
    %1953 = vmatmul.mubr.f32.gmra.mrb[0].mxu0 %v1789
    %v1954 = vpop.f32.mrb[0].mxu0
    %v1955 = vadd.f32 %v1885, %v1954
    %v1956 = vpop.f32.mrb[0].mxu0
    %1957 = vdwg.mxu0
    %v1958 = vld [vmem:[%s15] sm:$0x1]
    %v1960 = vlaneseq
    %v1961 = vshrl.u32 %v1960, 7
    %v1962 = vsub.s32 0, %v1961
    %v1963 = vrot.slane %v1958, %v1962
    %v1965 = vadd.f32 %v1955, %v1963
    %v1966 = vmax.f32 %v1965, 0.0
    %v1967 = vld [vmem:[%s16] sm:$0xff]
    %v1968 = vld [vmem:[%s16 + $0x8] sm:$0xff]
    %v1969 = vld [vmem:[%s16 + $0x10] sm:$0xff]
    %v1970 = vld [vmem:[%s16 + $0x18] sm:$0xff]
    %v1971 = vld [vmem:[%s17] sm:$0x1]
    %v1973 = vlaneseq
    %v1974 = vshrl.u32 %v1973, 7
    %v1975 = vsub.s32 0, %v1974
    %v1976 = vrot.slane %v1971, %v1975
    %v1979 = vsel %vm404, %v1966, 0
    %1981 = vmatprep.subr.mxu0 0.0
    %1982 = vmatpush1.msra.mxu0 %v1967
    %1983 = vmatprep.subr.mxu0 0.0
    %1984 = vmatpush1.msra.mxu0 %v1968
    %1985 = vmatprep.subr.mxu0 0.0
    %1986 = vmatpush1.msra.mxu0 %v1969
    %1987 = vmatprep.subr.mxu0 0.0
    %1988 = vmatpush1.msra.mxu0 %v1970
    %1989 = vmatprep.subr.mxu0 0.0
    %1990 = vmatpush1.msra.mxu0 0.0
    %1991 = vmatprep.subr.mxu0 0.0
    %1992 = vmatpush1.msra.mxu0 0.0
    %1993 = vmatprep.subr.mxu0 0.0
    %1994 = vmatpush1.msra.mxu0 0.0
    %1995 = vmatprep.subr.mxu0 0.0
    %1996 = vmatpush1.msra.mxu0 0.0
    %1997 = vmatprep.subr.mxu0 0.0
    %1998 = vmatpush1.msra.mxu0 0.0
    %1999 = vmatprep.subr.mxu0 0.0
    %2000 = vmatpush1.msra.mxu0 0.0
    %2001 = vmatprep.subr.mxu0 0.0
    %2002 = vmatpush1.msra.mxu0 0.0
    %2003 = vmatprep.subr.mxu0 0.0
    %2004 = vmatpush1.msra.mxu0 0.0
    %2005 = vmatprep.subr.mxu0 0.0
    %2006 = vmatpush1.msra.mxu0 0.0
    %2007 = vmatprep.subr.mxu0 0.0
    %2008 = vmatpush1.msra.mxu0 0.0
    %2009 = vmatprep.subr.mxu0 0.0
    %2010 = vmatpush1.msra.mxu0 0.0
    %2011 = vmatprep.subr.mxu0 0.0
    %2012 = vmatpush1.msra.mxu0 0.0
    %2013 = vmatprep.subr.mxu0 0.0
    %2014 = vmatpush1.msra.mxu0 0.0
    %2015 = vmatprep.subr.mxu0 0.0
    %2016 = vmatpush1.msra.mxu0 0.0
    %2017 = vmatprep.subr.mxu0 0.0
    %2018 = vmatpush1.msra.mxu0 0.0
    %2019 = vmatprep.subr.mxu0 0.0
    %2020 = vmatpush1.msra.mxu0 0.0
    %2021 = vmatprep.subr.mxu0 0.0
    %2022 = vmatpush1.msra.mxu0 0.0
    %2023 = vmatprep.subr.mxu0 0.0
    %2024 = vmatpush1.msra.mxu0 0.0
    %2025 = vmatprep.subr.mxu0 0.0
    %2026 = vmatpush1.msra.mxu0 0.0
    %2027 = vmatprep.subr.mxu0 0.0
    %2028 = vmatpush1.msra.mxu0 0.0
    %2029 = vmatprep.subr.mxu0 0.0
    %2030 = vmatpush1.msra.mxu0 0.0
    %2031 = vmatprep.subr.mxu0 0.0
    %2032 = vmatpush1.msra.mxu0 0.0
    %2033 = vmatprep.subr.mxu0 0.0
    %2034 = vmatpush1.msra.mxu0 0.0
    %2035 = vmatprep.subr.mxu0 0.0
    %2036 = vmatpush1.msra.mxu0 0.0
    %2037 = vmatprep.subr.mxu0 0.0
    %2038 = vmatpush1.msra.mxu0 0.0
    %2039 = vmatprep.subr.mxu0 0.0
    %2040 = vmatpush1.msra.mxu0 0.0
    %2041 = vmatprep.subr.mxu0 0.0
    %2042 = vmatpush1.msra.mxu0 0.0
    %2043 = vmatprep.subr.mxu0 0.0
    %2044 = vmatpush1.msra.mxu0 0.0
    %2045 = vmatprep.mubr.f32.mxu0 0.0
    %2046 = vmatmul.mubr.f32.gmra.mrb[0].mxu0 %v1979
    %v2047 = vpop.f32.mrb[0].mxu0
    %v2048 = vadd.f32 %v1976, %v2047
    %v2049 = vpop.f32.mrb[0].mxu0
    %2050 = vdwg.mxu0
    %vm2051 = vcmask 25600
    %2052 = vst.msk [vmem:[#allocation4] sm:$0x3] %vm2051, %v2048
    // Predicated region
    $region74: #{tpu_custom_call.1} parent=1 // pred_check
      _
    $region75: #{tpu_custom_call.1} parent=1 // pred_check_branch
      %2054 = sbr.rel (0) target = $region77
    $region76: #{tpu_custom_call.1} parent=1 // pred_region
      %s2056 = ssub.s32 32, 32
      %2057 = vsyncadd [#allocation5], %s2056
      %s2059 = sshll.u32 [#allocation4], 4
      %s2060 = int_to_ptr.vmem [resolvable:$true] %s2059
      %2062 = dma.vmem_to_hbm [thread:$0]  %s2060, 32, %s18, [#allocation5]
    $region77: #{tpu_custom_call.1} parent=1 // pred_fallthru
      _
    // Predicated region
    $region78: #{tpu_custom_call.1} parent=1 // pred_check
      _
    $region79: #{tpu_custom_call.1} parent=1 // pred_check_branch
      %2064 = sbr.rel (0) target = $region81
    $region80: #{tpu_custom_call.1} parent=1 // pred_region
      %2065 = dma.done [#allocation5], 32
    $region81: #{tpu_custom_call.1} parent=1 // pred_fallthru
      _
    %2066 = vsyncpa [#allocation5], 1

</llo_original>
